<compile_context>
chip_gen: v7x
topology: tpu7x:2x2x1
jax: 0.10.0
libtpu: 0.0.40
codegen_flags: <defaults>
</compile_context>

<pallas_src>
import functools
import math

import numpy as np
import jax
import jax.numpy as jnp
from jax import lax
from jax.experimental import pallas as pl
from jax.experimental.pallas import tpu as pltpu


# ----------------------------------------------------------------------------
# timing signal (identical to EMPDG's _gen_timing_signal)
# ----------------------------------------------------------------------------
def gen_timing_signal(length, channels, min_timescale=1.0, max_timescale=1.0e4):
    position = np.arange(length, dtype=np.float64)
    num_timescales = channels // 2
    log_timescale_increment = math.log(float(max_timescale) / float(min_timescale)) / (
        float(num_timescales) - 1
    )
    inv_timescales = min_timescale * np.exp(
        np.arange(num_timescales, dtype=np.float64) * -log_timescale_increment
    )
    scaled_time = position[:, None] * inv_timescales[None, :]
    signal = np.concatenate([np.sin(scaled_time), np.cos(scaled_time)], axis=1)
    signal = np.pad(signal, [[0, 0], [0, channels % 2]], mode="constant")
    return jnp.asarray(signal.reshape(1, length, channels), dtype=jnp.float32)


# ----------------------------------------------------------------------------
# in-kernel helpers
# ----------------------------------------------------------------------------
def _layer_norm(x, g, b, eps=1e-6):
    # matches EMPDG custom LayerNorm: unbiased std (ddof=1), eps added to std
    mean = jnp.mean(x, axis=-1, keepdims=True)
    d = x - mean
    var = jnp.sum(d * d, axis=-1, keepdims=True) * (1.0 / (x.shape[-1] - 1))
    std = jnp.sqrt(var)
    return g * (d / (std + eps)) + b


def _softmax(x):
    m = jnp.max(x, axis=-1, keepdims=True)
    e = jnp.exp(x - m)
    # approximate reciprocal runs on the EUP slot (essentially free next to exp)
    return e * pl.reciprocal(jnp.sum(e, axis=-1, keepdims=True), approx=True)


def _conv1d_k3(xf, wcat, bias, keep_prev, keep_next):
    """Conv1d(kernel=3, padding='both') on a flattened (Bt*L, Cin) slab.

    wcat is (3*Cin, Cout) with the three taps stacked along rows
    [W0 (for x[t-1]); W1 (for x[t]); W2 (for x[t+1])].
    keep_prev / keep_next are (Bt*L, 1) {0,1} masks that zero the rows that
    would otherwise bleed across sequence (and batch) boundaries after the roll.
    """
    N = xf.shape[0]
    x_prev = pltpu.roll(xf, shift=1, axis=0) * keep_prev        # x[t-1], 0 at t==0
    x_next = pltpu.roll(xf, shift=N - 1, axis=0) * keep_next    # x[t+1], 0 at t==L-1
    xc = jnp.concatenate([x_prev, xf, x_next], axis=-1)          # (N, 3*Cin)
    return jnp.dot(xc, wcat, preferred_element_type=jnp.float32) + bias


# ----------------------------------------------------------------------------
# Pallas kernel: one (batch block, layer) pair per grid step
# ----------------------------------------------------------------------------
def _encoder_kernel(num_heads, key_depth, value_depth,
                    in_ref, mask_ref, timing_ref, keep_prev_ref, keep_next_ref,
                    wp_ref, g_mha_ref, b_mha_ref, wqkv_ref, wo_ref,
                    g_ffn_ref, b_ffn_ref, w1_ref, b1_ref, w2_ref, b2_ref,
                    g_out_ref, b_out_ref,
                    out_ref, x_ref):
    l = pl.program_id(1)
    Bt, L, E = in_ref.shape
    H = x_ref.shape[-1]
    N = Bt * L
    Dk = key_depth
    Dv = value_depth
    dk = Dk // num_heads
    dv = Dv // num_heads

    # ---- once per batch block: embedding projection (no bias) + timing signal
    @pl.when(l == 0)
    def _():
        xe = in_ref[...].reshape(N, E)
        xp = jnp.dot(xe, wp_ref[...], preferred_element_type=jnp.float32)
        x_ref[...] = xp.reshape(Bt, L, H) + timing_ref[...]      # (1,L,H) broadcasts

    x = x_ref[...]                       # (Bt, L, H) carried activation
    xflat = x.reshape(N, H)

    # hoisted additive attention bias (one compare/select per grid step)
    neg = jnp.where(mask_ref[...] > 0.5, jnp.float32(-1e18), jnp.float32(0.0))  # (Bt,1,L)

    # ---- multi-head self-attention block (pre-LN, residual) -----------------
    xn = _layer_norm(xflat, g_mha_ref[...], b_mha_ref[...])
    qkv = jnp.dot(xn, wqkv_ref[...], preferred_element_type=jnp.float32)  # (N, 2Dk+Dv)
    q = qkv[:, :Dk].reshape(Bt, L, Dk)          # 1/sqrt(dk) already folded into Wq
    k = qkv[:, Dk:2 * Dk].reshape(Bt, L, Dk)
    v = qkv[:, 2 * Dk:].reshape(Bt, L, Dv)

    ctxs = []
    for h in range(num_heads):
        qh = q[:, :, h * dk:(h + 1) * dk]
        kh = k[:, :, h * dk:(h + 1) * dk]
        vh = v[:, :, h * dv:(h + 1) * dv]
        logits = jnp.einsum("bqd,bkd->bqk", qh, kh,
                            preferred_element_type=jnp.float32)   # (Bt, L, L)
        w = _softmax(logits + neg)
        ctxs.append(jnp.einsum("bqk,bkd->bqd", w, vh,
                               preferred_element_type=jnp.float32))
    ctx = jnp.concatenate(ctxs, axis=-1).reshape(N, Dv)           # merged heads
    y = jnp.dot(ctx, wo_ref[...], preferred_element_type=jnp.float32)  # one wide matmul
    xflat = xflat + y                                             # layer dropout = identity

    # ---- position-wise FFN: Conv(k3) -> ReLU -> Conv(k3), residual ----------
    xn = _layer_norm(xflat, g_ffn_ref[...], b_ffn_ref[...])
    kp = keep_prev_ref[...]
    kn = keep_next_ref[...]
    h1 = _conv1d_k3(xn, w1_ref[...], b1_ref[...], kp, kn)
    h1 = jnp.maximum(h1, 0.0)
    h2 = _conv1d_k3(h1, w2_ref[...], b2_ref[...], kp, kn)
    xflat = xflat + h2

    x_ref[...] = xflat.reshape(Bt, L, H)

    # ---- final LayerNorm, written once per batch block on the last layer ----
    @pl.when(l == pl.num_programs(1) - 1)
    def _():
        out_ref[...] = _layer_norm(xflat, g_out_ref[...],
                                   b_out_ref[...]).reshape(Bt, L, H)


# ----------------------------------------------------------------------------
# wrapper
# ----------------------------------------------------------------------------
def _choose_batch_block(B, L):
    # aim for Bt*L >= 128 (MXU M / sublane fill), but keep >= 2 batch blocks for
    # megacore sharding when that does not hurt the fill target.
    target = max(1, (128 + L - 1) // L)
    bt = min(B, target)
    if B // bt < 2 and (B // 2) * L >= 128:
        bt = B // 2
    bt = max(1, bt)
    while B % bt != 0:
        bt -= 1
    return bt


def semantic_encoder(inputs, mask, params, *, num_layers, num_heads,
                     total_key_depth, total_value_depth, batch_block=None):
    B, L, E = inputs.shape
    H = params["wp"].shape[1]
    F = params["b1"].shape[-1]
    Dk, Dv = total_key_depth, total_value_depth
    Dq = 2 * Dk + Dv
    dk = Dk // num_heads
    scale = jnp.float32(dk ** -0.5)

    Bt = batch_block if batch_block is not None else _choose_batch_block(B, L)
    N = Bt * L

    # ---- parameter prep (done once, outside the kernel) ----
    timing = params["timing"][:, :L, :]                              # (1, L, H)
    # fused QKV projection with the attention scale folded into Wq
    wqkv = jnp.concatenate([params["wq"] * scale, params["wk"], params["wv"]],
                           axis=-1)                                  # (nl, H, Dq)
    # conv taps stacked along the contraction dim -> single K=3*Cin matmul
    w1cat = params["w1"].reshape(num_layers, 3 * H, F)
    w2cat = params["w2"].reshape(num_layers, 3 * F, H)
    # sequence-boundary keep-masks for the rolled conv inputs (flattened slab)
    seq_pos = np.tile(np.arange(L), Bt)
    keep_prev = jnp.asarray(seq_pos != 0, jnp.float32).reshape(N, 1)
    keep_next = jnp.asarray(seq_pos != L - 1, jnp.float32).reshape(N, 1)

    kernel = functools.partial(_encoder_kernel, num_heads, Dk, Dv)

    def rep(shape):
        return pl.BlockSpec(shape, lambda b, l, n=len(shape): (0,) * n)

    def per_layer(tail):
        return pl.BlockSpec((None,) + tail,
                            lambda b, l, n=len(tail): (l,) + (0,) * n)

    grid_spec = pltpu.PrefetchScalarGridSpec(
        num_scalar_prefetch=0,
        grid=(B // Bt, num_layers),
        in_specs=[
            pl.BlockSpec((Bt, L, E), lambda b, l: (b, 0, 0)),   # inputs
            pl.BlockSpec((Bt, 1, L), lambda b, l: (b, 0, 0)),   # key padding mask
            rep((1, L, H)),                                     # timing signal
            rep((N, 1)),                                        # conv keep-mask (t-1)
            rep((N, 1)),                                        # conv keep-mask (t+1)
            rep((E, H)),                                        # embedding projection
            per_layer((1, H)), per_layer((1, H)),               # MHA pre-LN gamma/beta
            per_layer((H, Dq)),                                 # fused Wq|Wk|Wv
            per_layer((Dv, H)),                                 # attention output proj
            per_layer((1, H)), per_layer((1, H)),               # FFN pre-LN gamma/beta
            per_layer((3 * H, F)), per_layer((1, F)),           # conv1 taps + bias
            per_layer((3 * F, H)), per_layer((1, H)),           # conv2 taps + bias
            rep((1, H)), rep((1, H)),                           # final LN gamma/beta
        ],
        out_specs=pl.BlockSpec((Bt, L, H), lambda b, l: (b, 0, 0)),
        scratch_shapes=[pltpu.VMEM((Bt, L, H), jnp.float32)],   # carried activation
    )

    return pl.pallas_call(
        kernel,
        out_shape=jax.ShapeDtypeStruct((B, L, H), jnp.float32),
        grid_spec=grid_spec,
        compiler_params=pltpu.CompilerParams(
            dimension_semantics=("parallel", "arbitrary"),
            # safe on v5e/v6e/v7x; per-layer weight streaming keeps the footprint
            # to ~2 layers of weights + one batch block of activations.
            vmem_limit_bytes=32 * 1024 * 1024,
        ),
    )(inputs, mask, timing, keep_prev, keep_next, params["wp"],
      params["g_mha"], params["b_mha"], wqkv, params["wo"],
      params["g_ffn"], params["b_ffn"], w1cat, params["b1"],
      w2cat, params["b2"], params["g_out"], params["b_out"])


# ----------------------------------------------------------------------------
# deterministic parameter init (shapes from Semantic_Encoder.__init__)
# ----------------------------------------------------------------------------
def init_params(key, *, embedding_size, hidden_size, num_layers, num_heads,
                total_key_depth, total_value_depth, filter_size, max_length):
    E, H, Dk, Dv, F = (embedding_size, hidden_size, total_key_depth,
                       total_value_depth, filter_size)
    ks = jax.random.split(key, 10)

    def w(k, shape, scale=0.05):
        return scale * jax.random.normal(k, shape, dtype=jnp.float32)

    return dict(
        timing=gen_timing_signal(max_length, H),
        wp=w(ks[0], (E, H)),                       # nn.Linear(E, H, bias=False).weight.T
        wq=w(ks[1], (num_layers, H, Dk)),
        wk=w(ks[2], (num_layers, H, Dk)),
        wv=w(ks[3], (num_layers, H, Dv)),
        wo=w(ks[4], (num_layers, Dv, H)),
        w1=w(ks[5], (num_layers, 3, H, F)),        # Conv1d(H->F,k3).weight, per-tap transposed
        b1=w(ks[6], (num_layers, 1, F)),
        w2=w(ks[7], (num_layers, 3, F, H)),        # Conv1d(F->H,k3).weight, per-tap transposed
        b2=w(ks[8], (num_layers, 1, H)),
        g_mha=jnp.ones((num_layers, 1, H), jnp.float32),
        b_mha=jnp.zeros((num_layers, 1, H), jnp.float32),
        g_ffn=jnp.ones((num_layers, 1, H), jnp.float32),
        b_ffn=jnp.zeros((num_layers, 1, H), jnp.float32),
        g_out=jnp.ones((1, H), jnp.float32),
        b_out=jnp.zeros((1, H), jnp.float32),
    )


# ----------------------------------------------------------------------------
# pure-JAX reference (mirrors the PyTorch forward) for a correctness check
# ----------------------------------------------------------------------------
def reference_forward(inputs, mask, params, *, num_layers, num_heads,
                      total_key_depth, total_value_depth):
    L = inputs.shape[1]
    dk = total_key_depth // num_heads
    dv = total_value_depth // num_heads
    scale = dk ** -0.5

    def ln(x, g, b, eps=1e-6):
        m = jnp.mean(x, axis=-1, keepdims=True)
        d = x - m
        var = jnp.sum(d * d, axis=-1, keepdims=True) / (x.shape[-1] - 1)
        return g * d / (jnp.sqrt(var) + eps) + b

    def conv(x, wk3, bias):  # x: (B, L, Cin), wk3: (3, Cin, Cout)
        xp = jnp.pad(x, ((0, 0), (1, 1), (0, 0)))
        return xp[:, :-2] @ wk3[0] + xp[:, 1:-1] @ wk3[1] + xp[:, 2:] @ wk3[2] + bias

    x = inputs @ params["wp"]
    x = x + params["timing"][:, :L, :]
    for l in range(num_layers):
        xn = ln(x, params["g_mha"][l], params["b_mha"][l])
        q = xn @ params["wq"][l]
        k = xn @ params["wk"][l]
        v = xn @ params["wv"][l]
        y = jnp.zeros_like(x)
        for h in range(num_heads):
            qh = q[:, :, h * dk:(h + 1) * dk] * scale
            kh = k[:, :, h * dk:(h + 1) * dk]
            vh = v[:, :, h * dv:(h + 1) * dv]
            logits = jnp.einsum("bqd,bkd->bqk", qh, kh)          # (B, L, L)
            logits = jnp.where(mask > 0.5, -1e18, logits)        # mask (B,1,L) broadcasts
            wgt = jax.nn.softmax(logits, axis=-1)
            ctx = jnp.einsum("bqk,bkd->bqd", wgt, vh)
            y = y + ctx @ params["wo"][l][h * dv:(h + 1) * dv, :]
        x = x + y
        xn = ln(x, params["g_ffn"][l], params["b_ffn"][l])
        h1 = jnp.maximum(conv(xn, params["w1"][l], params["b1"][l]), 0.0)
        x = x + conv(h1, params["w2"][l], params["b2"][l])
    return ln(x, params["g_out"], params["b_out"])


if __name__ == "__main__":
    # small shapes consistent with the module
    B, L = 2, 8
    embedding_size = 32
    hidden_size = 32
    num_layers = 2
    num_heads = 2
    total_key_depth = 32
    total_value_depth = 32
    filter_size = 64
    max_length = 64

    key = jax.random.PRNGKey(0)
    k_in, k_p = jax.random.split(key)
    inputs = jax.random.normal(k_in, (B, L, embedding_size), dtype=jnp.float32)
    # padding mask: 1.0 at padded (masked) key positions — pad last 2 tokens of batch 1
    mask = jnp.zeros((B, 1, L), jnp.float32).at[1, 0, L - 2:].set(1.0)

    params = init_params(
        k_p, embedding_size=embedding_size, hidden_size=hidden_size,
        num_layers=num_layers, num_heads=num_heads,
        total_key_depth=total_key_depth, total_value_depth=total_value_depth,
        filter_size=filter_size, max_length=max_length)

    out = semantic_encoder(
        inputs, mask, params, num_layers=num_layers, num_heads=num_heads,
        total_key_depth=total_key_depth, total_value_depth=total_value_depth)
    out = jax.block_until_ready(out)

    ref = reference_forward(
        inputs, mask, params, num_layers=num_layers, num_heads=num_heads,
        total_key_depth=total_key_depth, total_value_depth=total_value_depth)
    assert out.shape == (B, L, hidden_size)
    assert jnp.allclose(out, ref, atol=2e-3, rtol=2e-3), float(jnp.max(jnp.abs(out - ref)))
    print("KERNEL_OK")
</pallas_src>

<mosaic_0001>
module attributes {stable_mosaic.version = 11 : i64} {
  func.func @_encoder_kernel(%arg0: i32, %arg1: i32, %arg2: memref<2x8x32xf32, #tpu.memory_space<vmem>>, %arg3: memref<2x1x8xf32, #tpu.memory_space<vmem>>, %arg4: memref<1x8x32xf32, #tpu.memory_space<vmem>>, %arg5: memref<16x1xf32, #tpu.memory_space<vmem>>, %arg6: memref<16x1xf32, #tpu.memory_space<vmem>>, %arg7: memref<32x32xf32, #tpu.memory_space<vmem>>, %arg8: memref<1x1x32xf32, #tpu.memory_space<vmem>>, %arg9: memref<1x1x32xf32, #tpu.memory_space<vmem>>, %arg10: memref<1x32x96xf32, #tpu.memory_space<vmem>>, %arg11: memref<1x32x32xf32, #tpu.memory_space<vmem>>, %arg12: memref<1x1x32xf32, #tpu.memory_space<vmem>>, %arg13: memref<1x1x32xf32, #tpu.memory_space<vmem>>, %arg14: memref<1x96x64xf32, #tpu.memory_space<vmem>>, %arg15: memref<1x1x64xf32, #tpu.memory_space<vmem>>, %arg16: memref<1x192x32xf32, #tpu.memory_space<vmem>>, %arg17: memref<1x1x32xf32, #tpu.memory_space<vmem>>, %arg18: memref<1x32xf32, #tpu.memory_space<vmem>>, %arg19: memref<1x32xf32, #tpu.memory_space<vmem>>, %arg20: memref<2x8x32xf32, #tpu.memory_space<vmem>>, %arg21: memref<2x8x32xf32, #tpu.memory_space<vmem>>) attributes {dimension_semantics = [#tpu.dimension_semantics<parallel>, #tpu.dimension_semantics<arbitrary>], iteration_bounds = array<i64: 1, 2>, scalar_prefetch = 0 : i64, scratch_operands = 1 : i64, tpu.core_type = #tpu.core_type<tc>, window_params = [{transform_indices = @transform_0, window_bounds = array<i64: 2, 8, 32>}, {transform_indices = @transform_1, window_bounds = array<i64: 2, 1, 8>}, {pipeline_mode = #tpu.pipeline_mode<synchronous>, transform_indices = @transform_2, window_bounds = array<i64: 1, 8, 32>}, {pipeline_mode = #tpu.pipeline_mode<synchronous>, transform_indices = @transform_3, window_bounds = array<i64: 16, 1>}, {pipeline_mode = #tpu.pipeline_mode<synchronous>, transform_indices = @transform_4, window_bounds = array<i64: 16, 1>}, {pipeline_mode = #tpu.pipeline_mode<synchronous>, transform_indices = @transform_5, window_bounds = array<i64: 32, 32>}, {transform_indices = @transform_6, window_bounds = array<i64: 1, 1, 32>}, {transform_indices = @transform_7, window_bounds = array<i64: 1, 1, 32>}, {transform_indices = @transform_8, window_bounds = array<i64: 1, 32, 96>}, {transform_indices = @transform_9, window_bounds = array<i64: 1, 32, 32>}, {transform_indices = @transform_10, window_bounds = array<i64: 1, 1, 32>}, {transform_indices = @transform_11, window_bounds = array<i64: 1, 1, 32>}, {transform_indices = @transform_12, window_bounds = array<i64: 1, 96, 64>}, {transform_indices = @transform_13, window_bounds = array<i64: 1, 1, 64>}, {transform_indices = @transform_14, window_bounds = array<i64: 1, 192, 32>}, {transform_indices = @transform_15, window_bounds = array<i64: 1, 1, 32>}, {pipeline_mode = #tpu.pipeline_mode<synchronous>, transform_indices = @transform_16, window_bounds = array<i64: 1, 32>}, {pipeline_mode = #tpu.pipeline_mode<synchronous>, transform_indices = @transform_17, window_bounds = array<i64: 1, 32>}, {transform_indices = @transform_18, window_bounds = array<i64: 2, 8, 32>}]} {
    %c0_i32 = arith.constant 0 : i32
    %0 = arith.cmpi eq, %arg1, %c0_i32 : i32
    %1 = arith.extui %0 : i1 to i32
    %c0_i32_0 = arith.constant 0 : i32
    %2 = arith.cmpi ne, %1, %c0_i32_0 : i32
    scf.if %2 {
      %c0_72 = arith.constant 0 : index
      %c0_73 = arith.constant 0 : index
      %c0_74 = arith.constant 0 : index
      %146 = vector.load %arg2[%c0_72, %c0_73, %c0_74] : memref<2x8x32xf32, #tpu.memory_space<vmem>>, vector<2x8x32xf32>
      %147 = vector.shape_cast %146 : vector<2x8x32xf32> to vector<16x32xf32>
      %c0_75 = arith.constant 0 : index
      %c0_76 = arith.constant 0 : index
      %148 = vector.load %arg7[%c0_75, %c0_76] : memref<32x32xf32, #tpu.memory_space<vmem>>, vector<32x32xf32>
      %cst_77 = arith.constant dense<0.000000e+00> : vector<16x32xf32>
      %149 = tpu.matmul %147, %148, %cst_77 {dimension_numbers = #tpu.dot_dimension_numbers<[1], [0], [0], [1], [0, 0, 1, 1], [], []>} : vector<16x32xf32>, vector<32x32xf32>, vector<16x32xf32> -> vector<16x32xf32>
      %150 = vector.shape_cast %149 : vector<16x32xf32> to vector<2x8x32xf32>
      %c0_78 = arith.constant 0 : index
      %c0_79 = arith.constant 0 : index
      %c0_80 = arith.constant 0 : index
      %151 = vector.load %arg4[%c0_78, %c0_79, %c0_80] : memref<1x8x32xf32, #tpu.memory_space<vmem>>, vector<1x8x32xf32>
      %152 = vector.broadcast %151 : vector<1x8x32xf32> to vector<2x8x32xf32>
      %153 = arith.addf %150, %152 : vector<2x8x32xf32>
      %c0_81 = arith.constant 0 : index
      %c0_82 = arith.constant 0 : index
      %c0_83 = arith.constant 0 : index
      %154 = vector.load %arg21[%c0_81, %c0_82, %c0_83] : memref<2x8x32xf32, #tpu.memory_space<vmem>>, vector<2x8x32xf32>
      tpu.vector_store %arg21[%c0_81, %c0_82, %c0_83], %153 {strides = array<i32>} : memref<2x8x32xf32, #tpu.memory_space<vmem>>, vector<2x8x32xf32>,
    } else {
    }
    %c0 = arith.constant 0 : index
    %c0_1 = arith.constant 0 : index
    %c0_2 = arith.constant 0 : index
    %3 = vector.load %arg21[%c0, %c0_1, %c0_2] : memref<2x8x32xf32, #tpu.memory_space<vmem>>, vector<2x8x32xf32>
    %4 = vector.shape_cast %3 : vector<2x8x32xf32> to vector<16x32xf32>
    %c0_3 = arith.constant 0 : index
    %c0_4 = arith.constant 0 : index
    %c0_5 = arith.constant 0 : index
    %5 = vector.load %arg3[%c0_3, %c0_4, %c0_5] : memref<2x1x8xf32, #tpu.memory_space<vmem>>, vector<2x1x8xf32>
    %cst = arith.constant 5.000000e-01 : f32
    %6 = vector.broadcast %cst : f32 to vector<2x1x8xf32>
    %7 = arith.cmpf ogt, %5, %6 : vector<2x1x8xf32>
    %cst_6 = arith.constant -9.99999984E+17 : f32
    %cst_7 = arith.constant 0.000000e+00 : f32
    %8 = vector.broadcast %cst_6 : f32 to vector<2x1x8xf32>
    %9 = vector.broadcast %cst_7 : f32 to vector<2x1x8xf32>
    %10 = arith.select %7, %8, %9 : vector<2x1x8xi1>, vector<2x1x8xf32>
    %c0_8 = arith.constant 0 : index
    %c0_9 = arith.constant 0 : index
    %c0_10 = arith.constant 0 : index
    %11 = vector.load %arg8[%c0_8, %c0_9, %c0_10] : memref<1x1x32xf32, #tpu.memory_space<vmem>>, vector<1x1x32xf32>
    %12 = vector.shape_cast %11 : vector<1x1x32xf32> to vector<1x32xf32>
    %c0_11 = arith.constant 0 : index
    %c0_12 = arith.constant 0 : index
    %c0_13 = arith.constant 0 : index
    %13 = vector.load %arg9[%c0_11, %c0_12, %c0_13] : memref<1x1x32xf32, #tpu.memory_space<vmem>>, vector<1x1x32xf32>
    %14 = vector.shape_cast %13 : vector<1x1x32xf32> to vector<1x32xf32>
    %cst_14 = arith.constant dense<0.000000e+00> : vector<16xf32>
    %15 = vector.multi_reduction <add>, %4, %cst_14 [1] : vector<16x32xf32> to vector<16xf32>
    %16 = vector.shape_cast %15 : vector<16xf32> to vector<16x1xf32>
    %cst_15 = arith.constant 3.200000e+01 : f32
    %17 = vector.broadcast %cst_15 : f32 to vector<16x1xf32>
    %18 = arith.divf %16, %17 : vector<16x1xf32>
    %19 = vector.broadcast %18 : vector<16x1xf32> to vector<16x32xf32>
    %20 = arith.subf %4, %19 : vector<16x32xf32>
    %21 = arith.mulf %20, %20 : vector<16x32xf32>
    %cst_16 = arith.constant dense<0.000000e+00> : vector<16xf32>
    %22 = vector.multi_reduction <add>, %21, %cst_16 [1] : vector<16x32xf32> to vector<16xf32>
    %23 = vector.shape_cast %22 : vector<16xf32> to vector<16x1xf32>
    %cst_17 = arith.constant 0.0322580636 : f32
    %24 = vector.broadcast %cst_17 : f32 to vector<16x1xf32>
    %25 = arith.mulf %23, %24 : vector<16x1xf32>
    %26 = math.sqrt %25 : vector<16x1xf32>
    %cst_18 = arith.constant 9.99999997E-7 : f32
    %27 = vector.broadcast %cst_18 : f32 to vector<16x1xf32>
    %28 = arith.addf %26, %27 : vector<16x1xf32>
    %29 = vector.broadcast %28 : vector<16x1xf32> to vector<16x32xf32>
    %30 = arith.divf %20, %29 : vector<16x32xf32>
    %31 = vector.broadcast %12 : vector<1x32xf32> to vector<16x32xf32>
    %32 = arith.mulf %31, %30 : vector<16x32xf32>
    %33 = vector.broadcast %14 : vector<1x32xf32> to vector<16x32xf32>
    %34 = arith.addf %32, %33 : vector<16x32xf32>
    %c0_19 = arith.constant 0 : index
    %c0_20 = arith.constant 0 : index
    %c0_21 = arith.constant 0 : index
    %35 = vector.load %arg10[%c0_19, %c0_20, %c0_21] : memref<1x32x96xf32, #tpu.memory_space<vmem>>, vector<1x32x96xf32>
    %36 = vector.shape_cast %35 : vector<1x32x96xf32> to vector<32x96xf32>
    %cst_22 = arith.constant dense<0.000000e+00> : vector<16x96xf32>
    %37 = tpu.matmul %34, %36, %cst_22 {dimension_numbers = #tpu.dot_dimension_numbers<[1], [0], [0], [1], [0, 0, 1, 1], [], []>} : vector<16x32xf32>, vector<32x96xf32>, vector<16x96xf32> -> vector<16x96xf32>
    %38 = vector.extract_strided_slice %37 {offsets = [0, 0], sizes = [16, 32], strides = [1, 1]} : vector<16x96xf32> to vector<16x32xf32>
    %39 = vector.shape_cast %38 : vector<16x32xf32> to vector<2x8x32xf32>
    %40 = vector.extract_strided_slice %37 {offsets = [0, 32], sizes = [16, 32], strides = [1, 1]} : vector<16x96xf32> to vector<16x32xf32>
    %41 = vector.shape_cast %40 : vector<16x32xf32> to vector<2x8x32xf32>
    %42 = vector.extract_strided_slice %37 {offsets = [0, 64], sizes = [16, 32], strides = [1, 1]} : vector<16x96xf32> to vector<16x32xf32>
    %43 = vector.shape_cast %42 : vector<16x32xf32> to vector<2x8x32xf32>
    %44 = vector.extract_strided_slice %39 {offsets = [0, 0, 0], sizes = [2, 8, 16], strides = [1, 1, 1]} : vector<2x8x32xf32> to vector<2x8x16xf32>
    %45 = vector.extract_strided_slice %41 {offsets = [0, 0, 0], sizes = [2, 8, 16], strides = [1, 1, 1]} : vector<2x8x32xf32> to vector<2x8x16xf32>
    %46 = vector.extract_strided_slice %43 {offsets = [0, 0, 0], sizes = [2, 8, 16], strides = [1, 1, 1]} : vector<2x8x32xf32> to vector<2x8x16xf32>
    "tpu.trace_start"() <{level = 10 : i32, message = "bqd,bkd->bqk"}> : () -> ()
    %cst_23 = arith.constant dense<0.000000e+00> : vector<2x8x8xf32>
    %47 = tpu.matmul %44, %45, %cst_23 {dimension_numbers = #tpu.dot_dimension_numbers<[2], [2], [1], [1], [0, 0, 0, 1, 1, 1], [0], [0]>} : vector<2x8x16xf32>, vector<2x8x16xf32>, vector<2x8x8xf32> -> vector<2x8x8xf32>
    "tpu.trace_stop"() : () -> ()
    %48 = vector.broadcast %10 : vector<2x1x8xf32> to vector<2x8x8xf32>
    %49 = arith.addf %47, %48 : vector<2x8x8xf32>
    %cst_24 = arith.constant dense<0xFF800000> : vector<2x8xf32>
    %50 = vector.multi_reduction <maximumf>, %49, %cst_24 [2] : vector<2x8x8xf32> to vector<2x8xf32>
    %51 = vector.shape_cast %50 : vector<2x8xf32> to vector<2x8x1xf32>
    %52 = vector.broadcast %51 : vector<2x8x1xf32> to vector<2x8x8xf32>
    %53 = arith.subf %49, %52 : vector<2x8x8xf32>
    %54 = math.exp %53 : vector<2x8x8xf32>
    %cst_25 = arith.constant dense<0.000000e+00> : vector<2x8xf32>
    %55 = vector.multi_reduction <add>, %54, %cst_25 [2] : vector<2x8x8xf32> to vector<2x8xf32>
    %56 = vector.shape_cast %55 : vector<2x8xf32> to vector<2x8x1xf32>
    %57 = tpu.reciprocal %56 {approx = true} : vector<2x8x1xf32> -> vector<2x8x1xf32>
    %58 = vector.broadcast %57 : vector<2x8x1xf32> to vector<2x8x8xf32>
    %59 = arith.mulf %54, %58 : vector<2x8x8xf32>
    "tpu.trace_start"() <{level = 10 : i32, message = "bqk,bkd->bqd"}> : () -> ()
    %cst_26 = arith.constant dense<0.000000e+00> : vector<2x8x16xf32>
    %60 = tpu.matmul %59, %46, %cst_26 {dimension_numbers = #tpu.dot_dimension_numbers<[2], [1], [1], [2], [0, 0, 0, 1, 1, 2], [0], [0]>} : vector<2x8x8xf32>, vector<2x8x16xf32>, vector<2x8x16xf32> -> vector<2x8x16xf32>
    "tpu.trace_stop"() : () -> ()
    %61 = vector.extract_strided_slice %39 {offsets = [0, 0, 16], sizes = [2, 8, 16], strides = [1, 1, 1]} : vector<2x8x32xf32> to vector<2x8x16xf32>
    %62 = vector.extract_strided_slice %41 {offsets = [0, 0, 16], sizes = [2, 8, 16], strides = [1, 1, 1]} : vector<2x8x32xf32> to vector<2x8x16xf32>
    %63 = vector.extract_strided_slice %43 {offsets = [0, 0, 16], sizes = [2, 8, 16], strides = [1, 1, 1]} : vector<2x8x32xf32> to vector<2x8x16xf32>
    "tpu.trace_start"() <{level = 10 : i32, message = "bqd,bkd->bqk"}> : () -> ()
    %cst_27 = arith.constant dense<0.000000e+00> : vector<2x8x8xf32>
    %64 = tpu.matmul %61, %62, %cst_27 {dimension_numbers = #tpu.dot_dimension_numbers<[2], [2], [1], [1], [0, 0, 0, 1, 1, 1], [0], [0]>} : vector<2x8x16xf32>, vector<2x8x16xf32>, vector<2x8x8xf32> -> vector<2x8x8xf32>
    "tpu.trace_stop"() : () -> ()
    %65 = vector.broadcast %10 : vector<2x1x8xf32> to vector<2x8x8xf32>
    %66 = arith.addf %64, %65 : vector<2x8x8xf32>
    %cst_28 = arith.constant dense<0xFF800000> : vector<2x8xf32>
    %67 = vector.multi_reduction <maximumf>, %66, %cst_28 [2] : vector<2x8x8xf32> to vector<2x8xf32>
    %68 = vector.shape_cast %67 : vector<2x8xf32> to vector<2x8x1xf32>
    %69 = vector.broadcast %68 : vector<2x8x1xf32> to vector<2x8x8xf32>
    %70 = arith.subf %66, %69 : vector<2x8x8xf32>
    %71 = math.exp %70 : vector<2x8x8xf32>
    %cst_29 = arith.constant dense<0.000000e+00> : vector<2x8xf32>
    %72 = vector.multi_reduction <add>, %71, %cst_29 [2] : vector<2x8x8xf32> to vector<2x8xf32>
    %73 = vector.shape_cast %72 : vector<2x8xf32> to vector<2x8x1xf32>
    %74 = tpu.reciprocal %73 {approx = true} : vector<2x8x1xf32> -> vector<2x8x1xf32>
    %75 = vector.broadcast %74 : vector<2x8x1xf32> to vector<2x8x8xf32>
    %76 = arith.mulf %71, %75 : vector<2x8x8xf32>
    "tpu.trace_start"() <{level = 10 : i32, message = "bqk,bkd->bqd"}> : () -> ()
    %cst_30 = arith.constant dense<0.000000e+00> : vector<2x8x16xf32>
    %77 = tpu.matmul %76, %63, %cst_30 {dimension_numbers = #tpu.dot_dimension_numbers<[2], [1], [1], [2], [0, 0, 0, 1, 1, 2], [0], [0]>} : vector<2x8x8xf32>, vector<2x8x16xf32>, vector<2x8x16xf32> -> vector<2x8x16xf32>
    "tpu.trace_stop"() : () -> ()
    %78 = tpu.concatenate %60, %77 in 2 : vector<2x8x16xf32>, vector<2x8x16xf32> -> vector<2x8x32xf32>
    %79 = vector.shape_cast %78 : vector<2x8x32xf32> to vector<16x32xf32>
    %c0_31 = arith.constant 0 : index
    %c0_32 = arith.constant 0 : index
    %c0_33 = arith.constant 0 : index
    %80 = vector.load %arg11[%c0_31, %c0_32, %c0_33] : memref<1x32x32xf32, #tpu.memory_space<vmem>>, vector<1x32x32xf32>
    %81 = vector.shape_cast %80 : vector<1x32x32xf32> to vector<32x32xf32>
    %cst_34 = arith.constant dense<0.000000e+00> : vector<16x32xf32>
    %82 = tpu.matmul %79, %81, %cst_34 {dimension_numbers = #tpu.dot_dimension_numbers<[1], [0], [0], [1], [0, 0, 1, 1], [], []>} : vector<16x32xf32>, vector<32x32xf32>, vector<16x32xf32> -> vector<16x32xf32>
    %83 = arith.addf %4, %82 : vector<16x32xf32>
    %c0_35 = arith.constant 0 : index
    %c0_36 = arith.constant 0 : index
    %c0_37 = arith.constant 0 : index
    %84 = vector.load %arg12[%c0_35, %c0_36, %c0_37] : memref<1x1x32xf32, #tpu.memory_space<vmem>>, vector<1x1x32xf32>
    %85 = vector.shape_cast %84 : vector<1x1x32xf32> to vector<1x32xf32>
    %c0_38 = arith.constant 0 : index
    %c0_39 = arith.constant 0 : index
    %c0_40 = arith.constant 0 : index
    %86 = vector.load %arg13[%c0_38, %c0_39, %c0_40] : memref<1x1x32xf32, #tpu.memory_space<vmem>>, vector<1x1x32xf32>
    %87 = vector.shape_cast %86 : vector<1x1x32xf32> to vector<1x32xf32>
    %cst_41 = arith.constant dense<0.000000e+00> : vector<16xf32>
    %88 = vector.multi_reduction <add>, %83, %cst_41 [1] : vector<16x32xf32> to vector<16xf32>
    %89 = vector.shape_cast %88 : vector<16xf32> to vector<16x1xf32>
    %cst_42 = arith.constant 3.200000e+01 : f32
    %90 = vector.broadcast %cst_42 : f32 to vector<16x1xf32>
    %91 = arith.divf %89, %90 : vector<16x1xf32>
    %92 = vector.broadcast %91 : vector<16x1xf32> to vector<16x32xf32>
    %93 = arith.subf %83, %92 : vector<16x32xf32>
    %94 = arith.mulf %93, %93 : vector<16x32xf32>
    %cst_43 = arith.constant dense<0.000000e+00> : vector<16xf32>
    %95 = vector.multi_reduction <add>, %94, %cst_43 [1] : vector<16x32xf32> to vector<16xf32>
    %96 = vector.shape_cast %95 : vector<16xf32> to vector<16x1xf32>
    %cst_44 = arith.constant 0.0322580636 : f32
    %97 = vector.broadcast %cst_44 : f32 to vector<16x1xf32>
    %98 = arith.mulf %96, %97 : vector<16x1xf32>
    %99 = math.sqrt %98 : vector<16x1xf32>
    %cst_45 = arith.constant 9.99999997E-7 : f32
    %100 = vector.broadcast %cst_45 : f32 to vector<16x1xf32>
    %101 = arith.addf %99, %100 : vector<16x1xf32>
    %102 = vector.broadcast %101 : vector<16x1xf32> to vector<16x32xf32>
    %103 = arith.divf %93, %102 : vector<16x32xf32>
    %104 = vector.broadcast %85 : vector<1x32xf32> to vector<16x32xf32>
    %105 = arith.mulf %104, %103 : vector<16x32xf32>
    %106 = vector.broadcast %87 : vector<1x32xf32> to vector<16x32xf32>
    %107 = arith.addf %105, %106 : vector<16x32xf32>
    %c0_46 = arith.constant 0 : index
    %c0_47 = arith.constant 0 : index
    %108 = vector.load %arg5[%c0_46, %c0_47] : memref<16x1xf32, #tpu.memory_space<vmem>>, vector<16x1xf32>
    %c0_48 = arith.constant 0 : index
    %c0_49 = arith.constant 0 : index
    %109 = vector.load %arg6[%c0_48, %c0_49] : memref<16x1xf32, #tpu.memory_space<vmem>>, vector<16x1xf32>
    %c0_50 = arith.constant 0 : index
    %c0_51 = arith.constant 0 : index
    %c0_52 = arith.constant 0 : index
    %110 = vector.load %arg14[%c0_50, %c0_51, %c0_52] : memref<1x96x64xf32, #tpu.memory_space<vmem>>, vector<1x96x64xf32>
    %111 = vector.shape_cast %110 : vector<1x96x64xf32> to vector<96x64xf32>
    %c0_53 = arith.constant 0 : index
    %c0_54 = arith.constant 0 : index
    %c0_55 = arith.constant 0 : index
    %112 = vector.load %arg15[%c0_53, %c0_54, %c0_55] : memref<1x1x64xf32, #tpu.memory_space<vmem>>, vector<1x1x64xf32>
    %113 = vector.shape_cast %112 : vector<1x1x64xf32> to vector<1x64xf32>
    %c1_i32 = arith.constant 1 : i32
    %114 = tpu.dynamic_rotate %107 by %c1_i32 dim 0 : vector<16x32xf32>, i32 -> vector<16x32xf32>
    %115 = vector.broadcast %108 : vector<16x1xf32> to vector<16x32xf32>
    %116 = arith.mulf %114, %115 : vector<16x32xf32>
    %c15_i32 = arith.constant 15 : i32
    %117 = tpu.dynamic_rotate %107 by %c15_i32 dim 0 : vector<16x32xf32>, i32 -> vector<16x32xf32>
    %118 = vector.broadcast %109 : vector<16x1xf32> to vector<16x32xf32>
    %119 = arith.mulf %117, %118 : vector<16x32xf32>
    %120 = tpu.concatenate %116, %107, %119 in 1 : vector<16x32xf32>, vector<16x32xf32>, vector<16x32xf32> -> vector<16x96xf32>
    %cst_56 = arith.constant dense<0.000000e+00> : vector<16x64xf32>
    %121 = tpu.matmul %120, %111, %cst_56 {dimension_numbers = #tpu.dot_dimension_numbers<[1], [0], [0], [1], [0, 0, 1, 1], [], []>} : vector<16x96xf32>, vector<96x64xf32>, vector<16x64xf32> -> vector<16x64xf32>
    %122 = vector.broadcast %113 : vector<1x64xf32> to vector<16x64xf32>
    %123 = arith.addf %121, %122 : vector<16x64xf32>
    %cst_57 = arith.constant 0.000000e+00 : f32
    %124 = vector.broadcast %cst_57 : f32 to vector<16x64xf32>
    %125 = arith.maximumf %123, %124 : vector<16x64xf32>
    %c0_58 = arith.constant 0 : index
    %c0_59 = arith.constant 0 : index
    %c0_60 = arith.constant 0 : index
    %126 = vector.load %arg16[%c0_58, %c0_59, %c0_60] : memref<1x192x32xf32, #tpu.memory_space<vmem>>, vector<1x192x32xf32>
    %127 = vector.shape_cast %126 : vector<1x192x32xf32> to vector<192x32xf32>
    %c0_61 = arith.constant 0 : index
    %c0_62 = arith.constant 0 : index
    %c0_63 = arith.constant 0 : index
    %128 = vector.load %arg17[%c0_61, %c0_62, %c0_63] : memref<1x1x32xf32, #tpu.memory_space<vmem>>, vector<1x1x32xf32>
    %129 = vector.shape_cast %128 : vector<1x1x32xf32> to vector<1x32xf32>
    %c1_i32_64 = arith.constant 1 : i32
    %130 = tpu.dynamic_rotate %125 by %c1_i32_64 dim 0 : vector<16x64xf32>, i32 -> vector<16x64xf32>
    %131 = vector.broadcast %108 : vector<16x1xf32> to vector<16x64xf32>
    %132 = arith.mulf %130, %131 : vector<16x64xf32>
    %c15_i32_65 = arith.constant 15 : i32
    %133 = tpu.dynamic_rotate %125 by %c15_i32_65 dim 0 : vector<16x64xf32>, i32 -> vector<16x64xf32>
    %134 = vector.broadcast %109 : vector<16x1xf32> to vector<16x64xf32>
    %135 = arith.mulf %133, %134 : vector<16x64xf32>
    %136 = tpu.concatenate %132, %125, %135 in 1 : vector<16x64xf32>, vector<16x64xf32>, vector<16x64xf32> -> vector<16x192xf32>
    %cst_66 = arith.constant dense<0.000000e+00> : vector<16x32xf32>
    %137 = tpu.matmul %136, %127, %cst_66 {dimension_numbers = #tpu.dot_dimension_numbers<[1], [0], [0], [1], [0, 0, 1, 1], [], []>} : vector<16x192xf32>, vector<192x32xf32>, vector<16x32xf32> -> vector<16x32xf32>
    %138 = vector.broadcast %129 : vector<1x32xf32> to vector<16x32xf32>
    %139 = arith.addf %137, %138 : vector<16x32xf32>
    %140 = arith.addf %83, %139 : vector<16x32xf32>
    %141 = vector.shape_cast %140 : vector<16x32xf32> to vector<2x8x32xf32>
    %c0_67 = arith.constant 0 : index
    %c0_68 = arith.constant 0 : index
    %c0_69 = arith.constant 0 : index
    %142 = vector.load %arg21[%c0_67, %c0_68, %c0_69] : memref<2x8x32xf32, #tpu.memory_space<vmem>>, vector<2x8x32xf32>
    tpu.vector_store %arg21[%c0_67, %c0_68, %c0_69], %141 {strides = array<i32>} : memref<2x8x32xf32, #tpu.memory_space<vmem>>, vector<2x8x32xf32>,
    %c1_i32_70 = arith.constant 1 : i32
    %143 = arith.cmpi eq, %arg1, %c1_i32_70 : i32
    %144 = arith.extui %143 : i1 to i32
    %c0_i32_71 = arith.constant 0 : i32
    %145 = arith.cmpi ne, %144, %c0_i32_71 : i32
    scf.if %145 {
      %c0_72 = arith.constant 0 : index
      %c0_73 = arith.constant 0 : index
      %146 = vector.load %arg18[%c0_72, %c0_73] : memref<1x32xf32, #tpu.memory_space<vmem>>, vector<1x32xf32>
      %c0_74 = arith.constant 0 : index
      %c0_75 = arith.constant 0 : index
      %147 = vector.load %arg19[%c0_74, %c0_75] : memref<1x32xf32, #tpu.memory_space<vmem>>, vector<1x32xf32>
      %cst_76 = arith.constant dense<0.000000e+00> : vector<16xf32>
      %148 = vector.multi_reduction <add>, %140, %cst_76 [1] : vector<16x32xf32> to vector<16xf32>
      %149 = vector.shape_cast %148 : vector<16xf32> to vector<16x1xf32>
      %cst_77 = arith.constant 3.200000e+01 : f32
      %150 = vector.broadcast %cst_77 : f32 to vector<16x1xf32>
      %151 = arith.divf %149, %150 : vector<16x1xf32>
      %152 = vector.broadcast %151 : vector<16x1xf32> to vector<16x32xf32>
      %153 = arith.subf %140, %152 : vector<16x32xf32>
      %154 = arith.mulf %153, %153 : vector<16x32xf32>
      %cst_78 = arith.constant dense<0.000000e+00> : vector<16xf32>
      %155 = vector.multi_reduction <add>, %154, %cst_78 [1] : vector<16x32xf32> to vector<16xf32>
      %156 = vector.shape_cast %155 : vector<16xf32> to vector<16x1xf32>
      %cst_79 = arith.constant 0.0322580636 : f32
      %157 = vector.broadcast %cst_79 : f32 to vector<16x1xf32>
      %158 = arith.mulf %156, %157 : vector<16x1xf32>
      %159 = math.sqrt %158 : vector<16x1xf32>
      %cst_80 = arith.constant 9.99999997E-7 : f32
      %160 = vector.broadcast %cst_80 : f32 to vector<16x1xf32>
      %161 = arith.addf %159, %160 : vector<16x1xf32>
      %162 = vector.broadcast %161 : vector<16x1xf32> to vector<16x32xf32>
      %163 = arith.divf %153, %162 : vector<16x32xf32>
      %164 = vector.broadcast %146 : vector<1x32xf32> to vector<16x32xf32>
      %165 = arith.mulf %164, %163 : vector<16x32xf32>
      %166 = vector.broadcast %147 : vector<1x32xf32> to vector<16x32xf32>
      %167 = arith.addf %165, %166 : vector<16x32xf32>
      %168 = vector.shape_cast %167 : vector<16x32xf32> to vector<2x8x32xf32>
      %c0_81 = arith.constant 0 : index
      %c0_82 = arith.constant 0 : index
      %c0_83 = arith.constant 0 : index
      %169 = vector.load %arg20[%c0_81, %c0_82, %c0_83] : memref<2x8x32xf32, #tpu.memory_space<vmem>>, vector<2x8x32xf32>
      tpu.vector_store %arg20[%c0_81, %c0_82, %c0_83], %168 {strides = array<i32>} : memref<2x8x32xf32, #tpu.memory_space<vmem>>, vector<2x8x32xf32>,
    } else {
    }
    return
  }
  func.func @transform_0(%arg0: i32, %arg1: i32) -> (i32, i32, i32) {
    %c0_i32 = arith.constant 0 : i32
    %c0_i32_0 = arith.constant 0 : i32
    %c0_i32_1 = arith.constant 0 : i32
    return %arg0, %c0_i32, %c0_i32_0 : i32, i32, i32
  }
  func.func @transform_1(%arg0: i32, %arg1: i32) -> (i32, i32, i32) {
    %c0_i32 = arith.constant 0 : i32
    %c0_i32_0 = arith.constant 0 : i32
    %c0_i32_1 = arith.constant 0 : i32
    return %arg0, %c0_i32, %c0_i32_0 : i32, i32, i32
  }
  func.func @transform_2(%arg0: i32, %arg1: i32) -> (i32, i32, i32) {
    %c0_i32 = arith.constant 0 : i32
    %c0_i32_0 = arith.constant 0 : i32
    %c0_i32_1 = arith.constant 0 : i32
    %c0_i32_2 = arith.constant 0 : i32
    return %c0_i32, %c0_i32_0, %c0_i32_1 : i32, i32, i32
  }
  func.func @transform_3(%arg0: i32, %arg1: i32) -> (i32, i32) {
    %c0_i32 = arith.constant 0 : i32
    %c0_i32_0 = arith.constant 0 : i32
    %c0_i32_1 = arith.constant 0 : i32
    return %c0_i32, %c0_i32_0 : i32, i32
  }
  func.func @transform_4(%arg0: i32, %arg1: i32) -> (i32, i32) {
    %c0_i32 = arith.constant 0 : i32
    %c0_i32_0 = arith.constant 0 : i32
    %c0_i32_1 = arith.constant 0 : i32
    return %c0_i32, %c0_i32_0 : i32, i32
  }
  func.func @transform_5(%arg0: i32, %arg1: i32) -> (i32, i32) {
    %c0_i32 = arith.constant 0 : i32
    %c0_i32_0 = arith.constant 0 : i32
    %c0_i32_1 = arith.constant 0 : i32
    return %c0_i32, %c0_i32_0 : i32, i32
  }
  func.func @transform_6(%arg0: i32, %arg1: i32) -> (i32, i32, i32) {
    %c0_i32 = arith.constant 0 : i32
    %c0_i32_0 = arith.constant 0 : i32
    %c0_i32_1 = arith.constant 0 : i32
    return %arg1, %c0_i32, %c0_i32_0 : i32, i32, i32
  }
  func.func @transform_7(%arg0: i32, %arg1: i32) -> (i32, i32, i32) {
    %c0_i32 = arith.constant 0 : i32
    %c0_i32_0 = arith.constant 0 : i32
    %c0_i32_1 = arith.constant 0 : i32
    return %arg1, %c0_i32, %c0_i32_0 : i32, i32, i32
  }
  func.func @transform_8(%arg0: i32, %arg1: i32) -> (i32, i32, i32) {
    %c0_i32 = arith.constant 0 : i32
    %c0_i32_0 = arith.constant 0 : i32
    %c0_i32_1 = arith.constant 0 : i32
    return %arg1, %c0_i32, %c0_i32_0 : i32, i32, i32
  }
  func.func @transform_9(%arg0: i32, %arg1: i32) -> (i32, i32, i32) {
    %c0_i32 = arith.constant 0 : i32
    %c0_i32_0 = arith.constant 0 : i32
    %c0_i32_1 = arith.constant 0 : i32
    return %arg1, %c0_i32, %c0_i32_0 : i32, i32, i32
  }
  func.func @transform_10(%arg0: i32, %arg1: i32) -> (i32, i32, i32) {
    %c0_i32 = arith.constant 0 : i32
    %c0_i32_0 = arith.constant 0 : i32
    %c0_i32_1 = arith.constant 0 : i32
    return %arg1, %c0_i32, %c0_i32_0 : i32, i32, i32
  }
  func.func @transform_11(%arg0: i32, %arg1: i32) -> (i32, i32, i32) {
    %c0_i32 = arith.constant 0 : i32
    %c0_i32_0 = arith.constant 0 : i32
    %c0_i32_1 = arith.constant 0 : i32
    return %arg1, %c0_i32, %c0_i32_0 : i32, i32, i32
  }
  func.func @transform_12(%arg0: i32, %arg1: i32) -> (i32, i32, i32) {
    %c0_i32 = arith.constant 0 : i32
    %c0_i32_0 = arith.constant 0 : i32
    %c0_i32_1 = arith.constant 0 : i32
    return %arg1, %c0_i32, %c0_i32_0 : i32, i32, i32
  }
  func.func @transform_13(%arg0: i32, %arg1: i32) -> (i32, i32, i32) {
    %c0_i32 = arith.constant 0 : i32
    %c0_i32_0 = arith.constant 0 : i32
    %c0_i32_1 = arith.constant 0 : i32
    return %arg1, %c0_i32, %c0_i32_0 : i32, i32, i32
  }
  func.func @transform_14(%arg0: i32, %arg1: i32) -> (i32, i32, i32) {
    %c0_i32 = arith.constant 0 : i32
    %c0_i32_0 = arith.constant 0 : i32
    %c0_i32_1 = arith.constant 0 : i32
    return %arg1, %c0_i32, %c0_i32_0 : i32, i32, i32
  }
  func.func @transform_15(%arg0: i32, %arg1: i32) -> (i32, i32, i32) {
    %c0_i32 = arith.constant 0 : i32
    %c0_i32_0 = arith.constant 0 : i32
    %c0_i32_1 = arith.constant 0 : i32
    return %arg1, %c0_i32, %c0_i32_0 : i32, i32, i32
  }
  func.func @transform_16(%arg0: i32, %arg1: i32) -> (i32, i32) {
    %c0_i32 = arith.constant 0 : i32
    %c0_i32_0 = arith.constant 0 : i32
    %c0_i32_1 = arith.constant 0 : i32
    return %c0_i32, %c0_i32_0 : i32, i32
  }
  func.func @transform_17(%arg0: i32, %arg1: i32) -> (i32, i32) {
    %c0_i32 = arith.constant 0 : i32
    %c0_i32_0 = arith.constant 0 : i32
    %c0_i32_1 = arith.constant 0 : i32
    return %c0_i32, %c0_i32_0 : i32, i32
  }
  func.func @transform_18(%arg0: i32, %arg1: i32) -> (i32, i32, i32) {
    %c0_i32 = arith.constant 0 : i32
    %c0_i32_0 = arith.constant 0 : i32
    %c0_i32_1 = arith.constant 0 : i32
    return %arg0, %c0_i32, %c0_i32_0 : i32, i32, i32
  }
}

</mosaic_0001>

<llo_original>
// kernel: tpu_custom_call.1
$region0: #{tpu_custom_call.1}
  #allocation0 [shape = 'u32[]', space=smem, size = 0x4, offset = 0x4, fixed_abs, tag = 'smem constant byte address 0x4 - core index']
  #allocation1 [shape = 'u32[144,128]{1,0:T(1,128)}', space=vmem, size = 0x12000, scoped, tag = 'internal scratch']
  #allocation2 [shape = 'f32[2,8,32]{2,1,0:T(8,128)}', space=vmem, size = 0x2000, scoped, tag = 'scratch operand']
  %s0 = inlined_call_operand.vmem [shape: f32[2,8,32], index: 0, kind: input, shape index: {}]
  %s1 = inlined_call_operand.vmem [shape: f32[2,1,8], index: 1, kind: input, shape index: {}]
  %s2 = inlined_call_operand.vmem [shape: f32[1,8,32], index: 2, kind: input, shape index: {}]
  %s3 = inlined_call_operand.vmem [shape: f32[16,1], index: 3, kind: input, shape index: {}]
  %s4 = inlined_call_operand.vmem [shape: f32[16,1], index: 4, kind: input, shape index: {}]
  %s5 = inlined_call_operand.vmem [shape: f32[32,32], index: 5, kind: input, shape index: {}]
  %s6 = inlined_call_operand.vmem [shape: f32[2,1,32], index: 6, kind: input, shape index: {}]
  %s7 = inlined_call_operand.vmem [shape: f32[2,1,32], index: 7, kind: input, shape index: {}]
  %s8 = inlined_call_operand.vmem [shape: f32[2,32,96], index: 8, kind: input, shape index: {}]
  %s9 = inlined_call_operand.vmem [shape: f32[2,32,32], index: 9, kind: input, shape index: {}]
  %s10 = inlined_call_operand.vmem [shape: f32[2,1,32], index: 10, kind: input, shape index: {}]
  %s11 = inlined_call_operand.vmem [shape: f32[2,1,32], index: 11, kind: input, shape index: {}]
  %s12 = inlined_call_operand.vmem [shape: f32[2,96,64], index: 12, kind: input, shape index: {}]
  %s13 = inlined_call_operand.vmem [shape: f32[2,1,64], index: 13, kind: input, shape index: {}]
  %s14 = inlined_call_operand.vmem [shape: f32[2,192,32], index: 14, kind: input, shape index: {}]
  %s15 = inlined_call_operand.vmem [shape: f32[2,1,32], index: 15, kind: input, shape index: {}]
  %s16 = inlined_call_operand.vmem [shape: f32[1,32], index: 16, kind: input, shape index: {}]
  %s17 = inlined_call_operand.vmem [shape: f32[1,32], index: 17, kind: input, shape index: {}]
  %s18 = inlined_call_operand.hbm [shape: f32[2,8,32], index: 18, kind: output, shape index: {}]
  %s19 = sld [smem:[#allocation0]]
  $region113: #{tpu_custom_call.1} parent=0
    _
  %s21 = ssub.s32 1, %s19
  %s22 = scalar_select 0, %s21, %s19
  $region1: #{tpu_custom_call.1} parent=0
    #allocation3 [shape = 'u8[8192]{0}', space=vmem, size = 0x2000, scoped, tag = 'output window, operand 0, single buffered']
    #allocation4 [shape = 's32[2]{0}', space=sflag, size = 0x8, scoped, tag = 'scoped memory for tpu_custom_call.1']
    %23 = vsyncpa [#allocation4], 0
    loop: start=0, step=1, limit=4
    $region2: #{tpu_custom_call.1} parent=1 // loop_pre_header
      _
    $region3: #{tpu_custom_call.1} parent=1 // loop_header
      %s25 = sphi 0, %s29
      %p26 = scmp.ge.s32.totalorder %s25, 4
      %s32 = sphi 0, %s44
      %s33 = sphi 0, %s40
      %s34 = sphi 0, %s32
      %s35 = sphi 0, %s33
      %s36 = sphi 0, %s34
      %s37 = sphi 0, %s35
      %s47 = sphi 0, %s49
      %s50 = sphi 0, %s47
      %s51 = sphi 0, %s50
      %s67 = sphi 0, %s51
      %s73 = sphi 0, %s75
      %s76 = sphi 0, %s73
      %s77 = sphi 0, %s76
      %s93 = sphi 0, %s77
      %s97 = sphi 0, %s97
      %s99 = sphi 0, %s97
      %s100 = sphi 0, %s99
      %s114 = sphi 0, %s100
      %s118 = sphi 0, %s118
      %s120 = sphi 0, %s118
      %s121 = sphi 0, %s120
      %s135 = sphi 0, %s121
      %s139 = sphi 0, %s139
      %s141 = sphi 0, %s139
      %s142 = sphi 0, %s141
      %s156 = sphi 0, %s142
      %s160 = sphi 0, %s160
      %s162 = sphi 0, %s160
      %s163 = sphi 0, %s162
      %s177 = sphi 0, %s163
      %s183 = sphi 0, %s185
      %s186 = sphi 0, %s183
      %s187 = sphi 0, %s186
      %s203 = sphi 0, %s187
      %s209 = sphi 0, %s211
      %s212 = sphi 0, %s209
      %s213 = sphi 0, %s212
      %s229 = sphi 0, %s213
      %s235 = sphi 0, %s237
      %s238 = sphi 0, %s235
      %s239 = sphi 0, %s238
      %s255 = sphi 0, %s239
      %s261 = sphi 0, %s263
      %s264 = sphi 0, %s261
      %s265 = sphi 0, %s264
      %s281 = sphi 0, %s265
      %s287 = sphi 0, %s289
      %s290 = sphi 0, %s287
      %s291 = sphi 0, %s290
      %s307 = sphi 0, %s291
      %s313 = sphi 0, %s315
      %s316 = sphi 0, %s313
      %s317 = sphi 0, %s316
      %s333 = sphi 0, %s317
      %s339 = sphi 0, %s341
      %s342 = sphi 0, %s339
      %s343 = sphi 0, %s342
      %s359 = sphi 0, %s343
      %s365 = sphi 0, %s367
      %s368 = sphi 0, %s365
      %s369 = sphi 0, %s368
      %s385 = sphi 0, %s369
      %s391 = sphi 0, %s393
      %s394 = sphi 0, %s391
      %s395 = sphi 0, %s394
      %s411 = sphi 0, %s395
      %s417 = sphi 0, %s419
      %s420 = sphi 0, %s417
      %s421 = sphi 0, %s420
      %s437 = sphi 0, %s421
      %s441 = sphi 0, %s441
      %s443 = sphi 0, %s441
      %s444 = sphi 0, %s443
      %s458 = sphi 0, %s444
      %s462 = sphi 0, %s462
      %s464 = sphi 0, %s462
      %s465 = sphi 0, %s464
      %s479 = sphi 0, %s465
      %s485 = sphi 0, %s487
      %s488 = sphi 0, %s485
      %s489 = sphi 0, %s488
      %s505 = sphi 0, %s489
    $region4: #{tpu_custom_call.1} parent=1 // loop_header_branch
      %28 = sbr.rel (%p26) target = $region8
    $region5: #{tpu_custom_call.1} parent=1 // loop_body
      %s30 = ssub.s32 %s25, 1
      %s31 = ssub.s32 %s25, 2
      %s38 = sadd.s32 1, %s33
      %p39 = scmp.ge.s32.totalorder %s38, 2
      %s40 = scalar_select %p39, 0, %s38
      %s41 = sadd.s32 1, %s32
      %s42 = scalar_select %p39, %s41, %s32
      %p43 = scmp.ge.s32.totalorder %s42, 1
      %s44 = scalar_select %p43, 0, %s42
      %s45 = ssub.s32 %s32, %s44
      %p46 = scmp.eq.s32.totalorder %s45, 0
      %s48 = sadd.s32 %s47, 1
      %s49 = scalar_select %p46, %s47, %s48
      %p52 = pneg %p46
      %p53 = scmp.eq.s32.totalorder %s25, 1
      %p54 = por %p52, %p53
      %p55 = scmp.ne.s32.totalorder %s47, %s50
      %p56 = scmp.eq.s32.totalorder %s25, 0
      %p57 = por %p55, %p56
      %p58 = scmp.ne.s32.totalorder %s47, %s50
      %p59 = scmp.eq.s32.totalorder %s30, 1
      %p60 = por %p58, %p59
      %p61 = scmp.ne.s32.totalorder %s50, %s51
      %p62 = scmp.eq.s32.totalorder %s30, 0
      %p63 = por %p61, %p62
      %p64 = scmp.ne.s32.totalorder %s50, %s51
      %p65 = scmp.eq.s32.totalorder %s31, 1
      %p66 = por %p64, %p65
      %p68 = scmp.ne.s32.totalorder %s51, %s67
      %p69 = scmp.eq.s32.totalorder %s31, 0
      %p70 = por %p68, %p69
      %s71 = ssub.s32 %s32, %s44
      %p72 = scmp.eq.s32.totalorder %s71, 0
      %s74 = sadd.s32 %s73, 1
      %s75 = scalar_select %p72, %s73, %s74
      %p78 = pneg %p72
      %p79 = scmp.eq.s32.totalorder %s25, 1
      %p80 = por %p78, %p79
      %p81 = scmp.ne.s32.totalorder %s73, %s76
      %p82 = scmp.eq.s32.totalorder %s25, 0
      %p83 = por %p81, %p82
      %p84 = scmp.ne.s32.totalorder %s73, %s76
      %p85 = scmp.eq.s32.totalorder %s30, 1
      %p86 = por %p84, %p85
      %p87 = scmp.ne.s32.totalorder %s76, %s77
      %p88 = scmp.eq.s32.totalorder %s30, 0
      %p89 = por %p87, %p88
      %p90 = scmp.ne.s32.totalorder %s76, %s77
      %p91 = scmp.eq.s32.totalorder %s31, 1
      %p92 = por %p90, %p91
      %p94 = scmp.ne.s32.totalorder %s77, %s93
      %p95 = scmp.eq.s32.totalorder %s31, 0
      %p96 = por %p94, %p95
      %s98 = sadd.s32 %s97, 1
      %p101 = scmp.eq.s32.totalorder %s25, 1
      %p102 = scmp.ne.s32.totalorder %s97, %s99
      %p103 = scmp.eq.s32.totalorder %s25, 0
      %p104 = por %p102, %p103
      %p105 = scmp.ne.s32.totalorder %s97, %s99
      %p106 = scmp.eq.s32.totalorder %s30, 1
      %p107 = por %p105, %p106
      %p108 = scmp.ne.s32.totalorder %s99, %s100
      %p109 = scmp.eq.s32.totalorder %s30, 0
      %p110 = por %p108, %p109
      %p111 = scmp.ne.s32.totalorder %s99, %s100
      %p112 = scmp.eq.s32.totalorder %s31, 1
      %p113 = por %p111, %p112
      %p115 = scmp.ne.s32.totalorder %s100, %s114
      %p116 = scmp.eq.s32.totalorder %s31, 0
      %p117 = por %p115, %p116
      %s119 = sadd.s32 %s118, 1
      %p122 = scmp.eq.s32.totalorder %s25, 1
      %p123 = scmp.ne.s32.totalorder %s118, %s120
      %p124 = scmp.eq.s32.totalorder %s25, 0
      %p125 = por %p123, %p124
      %p126 = scmp.ne.s32.totalorder %s118, %s120
      %p127 = scmp.eq.s32.totalorder %s30, 1
      %p128 = por %p126, %p127
      %p129 = scmp.ne.s32.totalorder %s120, %s121
      %p130 = scmp.eq.s32.totalorder %s30, 0
      %p131 = por %p129, %p130
      %p132 = scmp.ne.s32.totalorder %s120, %s121
      %p133 = scmp.eq.s32.totalorder %s31, 1
      %p134 = por %p132, %p133
      %p136 = scmp.ne.s32.totalorder %s121, %s135
      %p137 = scmp.eq.s32.totalorder %s31, 0
      %p138 = por %p136, %p137
      %s140 = sadd.s32 %s139, 1
      %p143 = scmp.eq.s32.totalorder %s25, 1
      %p144 = scmp.ne.s32.totalorder %s139, %s141
      %p145 = scmp.eq.s32.totalorder %s25, 0
      %p146 = por %p144, %p145
      %p147 = scmp.ne.s32.totalorder %s139, %s141
      %p148 = scmp.eq.s32.totalorder %s30, 1
      %p149 = por %p147, %p148
      %p150 = scmp.ne.s32.totalorder %s141, %s142
      %p151 = scmp.eq.s32.totalorder %s30, 0
      %p152 = por %p150, %p151
      %p153 = scmp.ne.s32.totalorder %s141, %s142
      %p154 = scmp.eq.s32.totalorder %s31, 1
      %p155 = por %p153, %p154
      %p157 = scmp.ne.s32.totalorder %s142, %s156
      %p158 = scmp.eq.s32.totalorder %s31, 0
      %p159 = por %p157, %p158
      %s161 = sadd.s32 %s160, 1
      %p164 = scmp.eq.s32.totalorder %s25, 1
      %p165 = scmp.ne.s32.totalorder %s160, %s162
      %p166 = scmp.eq.s32.totalorder %s25, 0
      %p167 = por %p165, %p166
      %p168 = scmp.ne.s32.totalorder %s160, %s162
      %p169 = scmp.eq.s32.totalorder %s30, 1
      %p170 = por %p168, %p169
      %p171 = scmp.ne.s32.totalorder %s162, %s163
      %p172 = scmp.eq.s32.totalorder %s30, 0
      %p173 = por %p171, %p172
      %p174 = scmp.ne.s32.totalorder %s162, %s163
      %p175 = scmp.eq.s32.totalorder %s31, 1
      %p176 = por %p174, %p175
      %p178 = scmp.ne.s32.totalorder %s163, %s177
      %p179 = scmp.eq.s32.totalorder %s31, 0
      %p180 = por %p178, %p179
      %s181 = ssub.s32 %s33, %s40
      %p182 = scmp.eq.s32.totalorder %s181, 0
      %s184 = sadd.s32 %s183, 1
      %s185 = scalar_select %p182, %s183, %s184
      %p188 = pneg %p182
      %p189 = scmp.eq.s32.totalorder %s25, 1
      %p190 = por %p188, %p189
      %p191 = scmp.ne.s32.totalorder %s183, %s186
      %p192 = scmp.eq.s32.totalorder %s25, 0
      %p193 = por %p191, %p192
      %p194 = scmp.ne.s32.totalorder %s183, %s186
      %p195 = scmp.eq.s32.totalorder %s30, 1
      %p196 = por %p194, %p195
      %p197 = scmp.ne.s32.totalorder %s186, %s187
      %p198 = scmp.eq.s32.totalorder %s30, 0
      %p199 = por %p197, %p198
      %p200 = scmp.ne.s32.totalorder %s186, %s187
      %p201 = scmp.eq.s32.totalorder %s31, 1
      %p202 = por %p200, %p201
      %p204 = scmp.ne.s32.totalorder %s187, %s203
      %p205 = scmp.eq.s32.totalorder %s31, 0
      %p206 = por %p204, %p205
      %s207 = ssub.s32 %s33, %s40
      %p208 = scmp.eq.s32.totalorder %s207, 0
      %s210 = sadd.s32 %s209, 1
      %s211 = scalar_select %p208, %s209, %s210
      %p214 = pneg %p208
      %p215 = scmp.eq.s32.totalorder %s25, 1
      %p216 = por %p214, %p215
      %p217 = scmp.ne.s32.totalorder %s209, %s212
      %p218 = scmp.eq.s32.totalorder %s25, 0
      %p219 = por %p217, %p218
      %p220 = scmp.ne.s32.totalorder %s209, %s212
      %p221 = scmp.eq.s32.totalorder %s30, 1
      %p222 = por %p220, %p221
      %p223 = scmp.ne.s32.totalorder %s212, %s213
      %p224 = scmp.eq.s32.totalorder %s30, 0
      %p225 = por %p223, %p224
      %p226 = scmp.ne.s32.totalorder %s212, %s213
      %p227 = scmp.eq.s32.totalorder %s31, 1
      %p228 = por %p226, %p227
      %p230 = scmp.ne.s32.totalorder %s213, %s229
      %p231 = scmp.eq.s32.totalorder %s31, 0
      %p232 = por %p230, %p231
      %s233 = ssub.s32 %s33, %s40
      %p234 = scmp.eq.s32.totalorder %s233, 0
      %s236 = sadd.s32 %s235, 1
      %s237 = scalar_select %p234, %s235, %s236
      %p240 = pneg %p234
      %p241 = scmp.eq.s32.totalorder %s25, 1
      %p242 = por %p240, %p241
      %p243 = scmp.ne.s32.totalorder %s235, %s238
      %p244 = scmp.eq.s32.totalorder %s25, 0
      %p245 = por %p243, %p244
      %p246 = scmp.ne.s32.totalorder %s235, %s238
      %p247 = scmp.eq.s32.totalorder %s30, 1
      %p248 = por %p246, %p247
      %p249 = scmp.ne.s32.totalorder %s238, %s239
      %p250 = scmp.eq.s32.totalorder %s30, 0
      %p251 = por %p249, %p250
      %p252 = scmp.ne.s32.totalorder %s238, %s239
      %p253 = scmp.eq.s32.totalorder %s31, 1
      %p254 = por %p252, %p253
      %p256 = scmp.ne.s32.totalorder %s239, %s255
      %p257 = scmp.eq.s32.totalorder %s31, 0
      %p258 = por %p256, %p257
      %s259 = ssub.s32 %s33, %s40
      %p260 = scmp.eq.s32.totalorder %s259, 0
      %s262 = sadd.s32 %s261, 1
      %s263 = scalar_select %p260, %s261, %s262
      %p266 = pneg %p260
      %p267 = scmp.eq.s32.totalorder %s25, 1
      %p268 = por %p266, %p267
      %p269 = scmp.ne.s32.totalorder %s261, %s264
      %p270 = scmp.eq.s32.totalorder %s25, 0
      %p271 = por %p269, %p270
      %p272 = scmp.ne.s32.totalorder %s261, %s264
      %p273 = scmp.eq.s32.totalorder %s30, 1
      %p274 = por %p272, %p273
      %p275 = scmp.ne.s32.totalorder %s264, %s265
      %p276 = scmp.eq.s32.totalorder %s30, 0
      %p277 = por %p275, %p276
      %p278 = scmp.ne.s32.totalorder %s264, %s265
      %p279 = scmp.eq.s32.totalorder %s31, 1
      %p280 = por %p278, %p279
      %p282 = scmp.ne.s32.totalorder %s265, %s281
      %p283 = scmp.eq.s32.totalorder %s31, 0
      %p284 = por %p282, %p283
      %s285 = ssub.s32 %s33, %s40
      %p286 = scmp.eq.s32.totalorder %s285, 0
      %s288 = sadd.s32 %s287, 1
      %s289 = scalar_select %p286, %s287, %s288
      %p292 = pneg %p286
      %p293 = scmp.eq.s32.totalorder %s25, 1
      %p294 = por %p292, %p293
      %p295 = scmp.ne.s32.totalorder %s287, %s290
      %p296 = scmp.eq.s32.totalorder %s25, 0
      %p297 = por %p295, %p296
      %p298 = scmp.ne.s32.totalorder %s287, %s290
      %p299 = scmp.eq.s32.totalorder %s30, 1
      %p300 = por %p298, %p299
      %p301 = scmp.ne.s32.totalorder %s290, %s291
      %p302 = scmp.eq.s32.totalorder %s30, 0
      %p303 = por %p301, %p302
      %p304 = scmp.ne.s32.totalorder %s290, %s291
      %p305 = scmp.eq.s32.totalorder %s31, 1
      %p306 = por %p304, %p305
      %p308 = scmp.ne.s32.totalorder %s291, %s307
      %p309 = scmp.eq.s32.totalorder %s31, 0
      %p310 = por %p308, %p309
      %s311 = ssub.s32 %s33, %s40
      %p312 = scmp.eq.s32.totalorder %s311, 0
      %s314 = sadd.s32 %s313, 1
      %s315 = scalar_select %p312, %s313, %s314
      %p318 = pneg %p312
      %p319 = scmp.eq.s32.totalorder %s25, 1
      %p320 = por %p318, %p319
      %p321 = scmp.ne.s32.totalorder %s313, %s316
      %p322 = scmp.eq.s32.totalorder %s25, 0
      %p323 = por %p321, %p322
      %p324 = scmp.ne.s32.totalorder %s313, %s316
      %p325 = scmp.eq.s32.totalorder %s30, 1
      %p326 = por %p324, %p325
      %p327 = scmp.ne.s32.totalorder %s316, %s317
      %p328 = scmp.eq.s32.totalorder %s30, 0
      %p329 = por %p327, %p328
      %p330 = scmp.ne.s32.totalorder %s316, %s317
      %p331 = scmp.eq.s32.totalorder %s31, 1
      %p332 = por %p330, %p331
      %p334 = scmp.ne.s32.totalorder %s317, %s333
      %p335 = scmp.eq.s32.totalorder %s31, 0
      %p336 = por %p334, %p335
      %s337 = ssub.s32 %s33, %s40
      %p338 = scmp.eq.s32.totalorder %s337, 0
      %s340 = sadd.s32 %s339, 1
      %s341 = scalar_select %p338, %s339, %s340
      %p344 = pneg %p338
      %p345 = scmp.eq.s32.totalorder %s25, 1
      %p346 = por %p344, %p345
      %p347 = scmp.ne.s32.totalorder %s339, %s342
      %p348 = scmp.eq.s32.totalorder %s25, 0
      %p349 = por %p347, %p348
      %p350 = scmp.ne.s32.totalorder %s339, %s342
      %p351 = scmp.eq.s32.totalorder %s30, 1
      %p352 = por %p350, %p351
      %p353 = scmp.ne.s32.totalorder %s342, %s343
      %p354 = scmp.eq.s32.totalorder %s30, 0
      %p355 = por %p353, %p354
      %p356 = scmp.ne.s32.totalorder %s342, %s343
      %p357 = scmp.eq.s32.totalorder %s31, 1
      %p358 = por %p356, %p357
      %p360 = scmp.ne.s32.totalorder %s343, %s359
      %p361 = scmp.eq.s32.totalorder %s31, 0
      %p362 = por %p360, %p361
      %s363 = ssub.s32 %s33, %s40
      %p364 = scmp.eq.s32.totalorder %s363, 0
      %s366 = sadd.s32 %s365, 1
      %s367 = scalar_select %p364, %s365, %s366
      %p370 = pneg %p364
      %p371 = scmp.eq.s32.totalorder %s25, 1
      %p372 = por %p370, %p371
      %p373 = scmp.ne.s32.totalorder %s365, %s368
      %p374 = scmp.eq.s32.totalorder %s25, 0
      %p375 = por %p373, %p374
      %p376 = scmp.ne.s32.totalorder %s365, %s368
      %p377 = scmp.eq.s32.totalorder %s30, 1
      %p378 = por %p376, %p377
      %p379 = scmp.ne.s32.totalorder %s368, %s369
      %p380 = scmp.eq.s32.totalorder %s30, 0
      %p381 = por %p379, %p380
      %p382 = scmp.ne.s32.totalorder %s368, %s369
      %p383 = scmp.eq.s32.totalorder %s31, 1
      %p384 = por %p382, %p383
      %p386 = scmp.ne.s32.totalorder %s369, %s385
      %p387 = scmp.eq.s32.totalorder %s31, 0
      %p388 = por %p386, %p387
      %s389 = ssub.s32 %s33, %s40
      %p390 = scmp.eq.s32.totalorder %s389, 0
      %s392 = sadd.s32 %s391, 1
      %s393 = scalar_select %p390, %s391, %s392
      %p396 = pneg %p390
      %p397 = scmp.eq.s32.totalorder %s25, 1
      %p398 = por %p396, %p397
      %p399 = scmp.ne.s32.totalorder %s391, %s394
      %p400 = scmp.eq.s32.totalorder %s25, 0
      %p401 = por %p399, %p400
      %p402 = scmp.ne.s32.totalorder %s391, %s394
      %p403 = scmp.eq.s32.totalorder %s30, 1
      %p404 = por %p402, %p403
      %p405 = scmp.ne.s32.totalorder %s394, %s395
      %p406 = scmp.eq.s32.totalorder %s30, 0
      %p407 = por %p405, %p406
      %p408 = scmp.ne.s32.totalorder %s394, %s395
      %p409 = scmp.eq.s32.totalorder %s31, 1
      %p410 = por %p408, %p409
      %p412 = scmp.ne.s32.totalorder %s395, %s411
      %p413 = scmp.eq.s32.totalorder %s31, 0
      %p414 = por %p412, %p413
      %s415 = ssub.s32 %s33, %s40
      %p416 = scmp.eq.s32.totalorder %s415, 0
      %s418 = sadd.s32 %s417, 1
      %s419 = scalar_select %p416, %s417, %s418
      %p422 = pneg %p416
      %p423 = scmp.eq.s32.totalorder %s25, 1
      %p424 = por %p422, %p423
      %p425 = scmp.ne.s32.totalorder %s417, %s420
      %p426 = scmp.eq.s32.totalorder %s25, 0
      %p427 = por %p425, %p426
      %p428 = scmp.ne.s32.totalorder %s417, %s420
      %p429 = scmp.eq.s32.totalorder %s30, 1
      %p430 = por %p428, %p429
      %p431 = scmp.ne.s32.totalorder %s420, %s421
      %p432 = scmp.eq.s32.totalorder %s30, 0
      %p433 = por %p431, %p432
      %p434 = scmp.ne.s32.totalorder %s420, %s421
      %p435 = scmp.eq.s32.totalorder %s31, 1
      %p436 = por %p434, %p435
      %p438 = scmp.ne.s32.totalorder %s421, %s437
      %p439 = scmp.eq.s32.totalorder %s31, 0
      %p440 = por %p438, %p439
      %s442 = sadd.s32 %s441, 1
      %p445 = scmp.eq.s32.totalorder %s25, 1
      %p446 = scmp.ne.s32.totalorder %s441, %s443
      %p447 = scmp.eq.s32.totalorder %s25, 0
      %p448 = por %p446, %p447
      %p449 = scmp.ne.s32.totalorder %s441, %s443
      %p450 = scmp.eq.s32.totalorder %s30, 1
      %p451 = por %p449, %p450
      %p452 = scmp.ne.s32.totalorder %s443, %s444
      %p453 = scmp.eq.s32.totalorder %s30, 0
      %p454 = por %p452, %p453
      %p455 = scmp.ne.s32.totalorder %s443, %s444
      %p456 = scmp.eq.s32.totalorder %s31, 1
      %p457 = por %p455, %p456
      %p459 = scmp.ne.s32.totalorder %s444, %s458
      %p460 = scmp.eq.s32.totalorder %s31, 0
      %p461 = por %p459, %p460
      %s463 = sadd.s32 %s462, 1
      %p466 = scmp.eq.s32.totalorder %s25, 1
      %p467 = scmp.ne.s32.totalorder %s462, %s464
      %p468 = scmp.eq.s32.totalorder %s25, 0
      %p469 = por %p467, %p468
      %p470 = scmp.ne.s32.totalorder %s462, %s464
      %p471 = scmp.eq.s32.totalorder %s30, 1
      %p472 = por %p470, %p471
      %p473 = scmp.ne.s32.totalorder %s464, %s465
      %p474 = scmp.eq.s32.totalorder %s30, 0
      %p475 = por %p473, %p474
      %p476 = scmp.ne.s32.totalorder %s464, %s465
      %p477 = scmp.eq.s32.totalorder %s31, 1
      %p478 = por %p476, %p477
      %p480 = scmp.ne.s32.totalorder %s465, %s479
      %p481 = scmp.eq.s32.totalorder %s31, 0
      %p482 = por %p480, %p481
      %s483 = ssub.s32 %s32, %s44
      %p484 = scmp.eq.s32.totalorder %s483, 0
      %s486 = sadd.s32 %s485, 1
      %s487 = scalar_select %p484, %s485, %s486
      %p490 = pneg %p484
      %p491 = scmp.eq.s32.totalorder %s25, 1
      %p492 = por %p490, %p491
      %p493 = scmp.ne.s32.totalorder %s485, %s488
      %p494 = scmp.eq.s32.totalorder %s25, 0
      %p495 = por %p493, %p494
      %p496 = scmp.ne.s32.totalorder %s485, %s488
      %p497 = scmp.eq.s32.totalorder %s30, 1
      %p498 = por %p496, %p497
      %p499 = scmp.ne.s32.totalorder %s488, %s489
      %p500 = scmp.eq.s32.totalorder %s30, 0
      %p501 = por %p499, %p500
      %p502 = scmp.ne.s32.totalorder %s488, %s489
      %p503 = scmp.eq.s32.totalorder %s31, 1
      %p504 = por %p502, %p503
      %p506 = scmp.ne.s32.totalorder %s489, %s505
      %p507 = scmp.eq.s32.totalorder %s31, 0
      %p508 = por %p506, %p507
      %p509 = scmp.le.s32.totalorder 1, %s25
      %p510 = scmp.lt.s32.totalorder %s25, 3
      %p511 = pnand %p509, %p510
      %p512 = pneg %p511
      // Predicated region
      $region9: #{tpu_custom_call.1} parent=5 // pred_check
        _
      $region10: #{tpu_custom_call.1} parent=5 // pred_check_branch
        %514 = sbr.rel (%p511) target = $region12
      $region11: #{tpu_custom_call.1} parent=5 // pred_region
        %s515 = ssub.s32 %s25, 1
        // Predicated region
        $region13: #{tpu_custom_call.1} parent=11 // pred_check
          %p516 = pneg %p63
        $region14: #{tpu_custom_call.1} parent=11 // pred_check_branch
          %518 = sbr.rel (%p516) target = $region16
        $region15: #{tpu_custom_call.1} parent=11 // pred_region
          %s519 = smul.u32 2, %s34
          %p520 = scmp.lt.s32.totalorder %s519, 1
          %s521 = scalar_select %p520, %s519, 1
          %s522 = smul.addr %s521, 8
          %s523 = scalar_lea.vmem %s0, %s522
          %s524 = smul.u32 2, %s34
        $region16: #{tpu_custom_call.1} parent=11 // pred_fallthru
          _
        // Predicated region
        $region17: #{tpu_custom_call.1} parent=11 // pred_check
          %p525 = pneg %p89
        $region18: #{tpu_custom_call.1} parent=11 // pred_check_branch
          %527 = sbr.rel (%p525) target = $region20
        $region19: #{tpu_custom_call.1} parent=11 // pred_region
          %s528 = smul.u32 2, %s34
          %p529 = scmp.lt.s32.totalorder %s528, 1
          %s530 = scalar_select %p529, %s528, 1
          %s531 = scalar_lea.vmem %s1, %s530
          %s532 = smul.u32 2, %s34
        $region20: #{tpu_custom_call.1} parent=11 // pred_fallthru
          _
        // Predicated region
        $region21: #{tpu_custom_call.1} parent=11 // pred_check
          %p533 = pneg %p110
        $region22: #{tpu_custom_call.1} parent=11 // pred_check_branch
          %535 = sbr.rel (%p533) target = $region24
        $region23: #{tpu_custom_call.1} parent=11 // pred_region
          _
        $region24: #{tpu_custom_call.1} parent=11 // pred_fallthru
          _
        // Predicated region
        $region25: #{tpu_custom_call.1} parent=11 // pred_check
          %p536 = pneg %p131
        $region26: #{tpu_custom_call.1} parent=11 // pred_check_branch
          %538 = sbr.rel (%p536) target = $region28
        $region27: #{tpu_custom_call.1} parent=11 // pred_region
          _
        $region28: #{tpu_custom_call.1} parent=11 // pred_fallthru
          _
        // Predicated region
        $region29: #{tpu_custom_call.1} parent=11 // pred_check
          %p539 = pneg %p152
        $region30: #{tpu_custom_call.1} parent=11 // pred_check_branch
          %541 = sbr.rel (%p539) target = $region32
        $region31: #{tpu_custom_call.1} parent=11 // pred_region
          _
        $region32: #{tpu_custom_call.1} parent=11 // pred_fallthru
          _
        // Predicated region
        $region33: #{tpu_custom_call.1} parent=11 // pred_check
          %p542 = pneg %p173
        $region34: #{tpu_custom_call.1} parent=11 // pred_check_branch
          %544 = sbr.rel (%p542) target = $region36
        $region35: #{tpu_custom_call.1} parent=11 // pred_region
          _
        $region36: #{tpu_custom_call.1} parent=11 // pred_fallthru
          _
        // Predicated region
        $region37: #{tpu_custom_call.1} parent=11 // pred_check
          %p545 = pneg %p454
        $region38: #{tpu_custom_call.1} parent=11 // pred_check_branch
          %547 = sbr.rel (%p545) target = $region40
        $region39: #{tpu_custom_call.1} parent=11 // pred_region
          _
        $region40: #{tpu_custom_call.1} parent=11 // pred_fallthru
          _
        // Predicated region
        $region41: #{tpu_custom_call.1} parent=11 // pred_check
          %p548 = pneg %p475
        $region42: #{tpu_custom_call.1} parent=11 // pred_check_branch
          %550 = sbr.rel (%p548) target = $region44
        $region43: #{tpu_custom_call.1} parent=11 // pred_region
          _
        $region44: #{tpu_custom_call.1} parent=11 // pred_fallthru
          _
      $region12: #{tpu_custom_call.1} parent=5 // pred_fallthru
        _
      %p551 = scmp.lt.s32.totalorder %s25, 2
      // Predicated region
      $region45: #{tpu_custom_call.1} parent=5 // pred_check
        %p552 = pneg %p551
      $region46: #{tpu_custom_call.1} parent=5 // pred_check_branch
        %554 = sbr.rel (%p552) target = $region48
      $region47: #{tpu_custom_call.1} parent=5 // pred_region
        // Predicated region
        $region49: #{tpu_custom_call.1} parent=47 // pred_check
          %p555 = pneg %p193
        $region50: #{tpu_custom_call.1} parent=47 // pred_check_branch
          %557 = sbr.rel (%p555) target = $region52
        $region51: #{tpu_custom_call.1} parent=47 // pred_region
          %p558 = scmp.lt.s32.totalorder %s33, 1
          %s559 = scalar_select %p558, %s33, 1
          %s560 = scalar_lea.vmem %s6, %s559
        $region52: #{tpu_custom_call.1} parent=47 // pred_fallthru
          _
        // Predicated region
        $region53: #{tpu_custom_call.1} parent=47 // pred_check
          %p561 = pneg %p219
        $region54: #{tpu_custom_call.1} parent=47 // pred_check_branch
          %563 = sbr.rel (%p561) target = $region56
        $region55: #{tpu_custom_call.1} parent=47 // pred_region
          %p564 = scmp.lt.s32.totalorder %s33, 1
          %s565 = scalar_select %p564, %s33, 1
          %s566 = scalar_lea.vmem %s7, %s565
        $region56: #{tpu_custom_call.1} parent=47 // pred_fallthru
          _
        // Predicated region
        $region57: #{tpu_custom_call.1} parent=47 // pred_check
          %p567 = pneg %p245
        $region58: #{tpu_custom_call.1} parent=47 // pred_check_branch
          %569 = sbr.rel (%p567) target = $region60
        $region59: #{tpu_custom_call.1} parent=47 // pred_region
          %p570 = scmp.lt.s32.totalorder %s33, 1
          %s571 = scalar_select %p570, %s33, 1
          %s572 = smul.addr %s571, 4
          %s573 = smul.addr %s572, 8
          %s574 = scalar_lea.vmem %s8, %s573
        $region60: #{tpu_custom_call.1} parent=47 // pred_fallthru
          _
        // Predicated region
        $region61: #{tpu_custom_call.1} parent=47 // pred_check
          %p575 = pneg %p271
        $region62: #{tpu_custom_call.1} parent=47 // pred_check_branch
          %577 = sbr.rel (%p575) target = $region64
        $region63: #{tpu_custom_call.1} parent=47 // pred_region
          %p578 = scmp.lt.s32.totalorder %s33, 1
          %s579 = scalar_select %p578, %s33, 1
          %s580 = smul.addr %s579, 4
          %s581 = smul.addr %s580, 8
          %s582 = scalar_lea.vmem %s9, %s581
        $region64: #{tpu_custom_call.1} parent=47 // pred_fallthru
          _
        // Predicated region
        $region65: #{tpu_custom_call.1} parent=47 // pred_check
          %p583 = pneg %p297
        $region66: #{tpu_custom_call.1} parent=47 // pred_check_branch
          %585 = sbr.rel (%p583) target = $region68
        $region67: #{tpu_custom_call.1} parent=47 // pred_region
          %p586 = scmp.lt.s32.totalorder %s33, 1
          %s587 = scalar_select %p586, %s33, 1
          %s588 = scalar_lea.vmem %s10, %s587
        $region68: #{tpu_custom_call.1} parent=47 // pred_fallthru
          _
        // Predicated region
        $region69: #{tpu_custom_call.1} parent=47 // pred_check
          %p589 = pneg %p323
        $region70: #{tpu_custom_call.1} parent=47 // pred_check_branch
          %591 = sbr.rel (%p589) target = $region72
        $region71: #{tpu_custom_call.1} parent=47 // pred_region
          %p592 = scmp.lt.s32.totalorder %s33, 1
          %s593 = scalar_select %p592, %s33, 1
          %s594 = scalar_lea.vmem %s11, %s593
        $region72: #{tpu_custom_call.1} parent=47 // pred_fallthru
          _
        // Predicated region
        $region73: #{tpu_custom_call.1} parent=47 // pred_check
          %p595 = pneg %p349
        $region74: #{tpu_custom_call.1} parent=47 // pred_check_branch
          %597 = sbr.rel (%p595) target = $region76
        $region75: #{tpu_custom_call.1} parent=47 // pred_region
          %p598 = scmp.lt.s32.totalorder %s33, 1
          %s599 = scalar_select %p598, %s33, 1
          %s600 = smul.addr %s599, 12
          %s601 = smul.addr %s600, 8
          %s602 = scalar_lea.vmem %s12, %s601
        $region76: #{tpu_custom_call.1} parent=47 // pred_fallthru
          _
        // Predicated region
        $region77: #{tpu_custom_call.1} parent=47 // pred_check
          %p603 = pneg %p375
        $region78: #{tpu_custom_call.1} parent=47 // pred_check_branch
          %605 = sbr.rel (%p603) target = $region80
        $region79: #{tpu_custom_call.1} parent=47 // pred_region
          %p606 = scmp.lt.s32.totalorder %s33, 1
          %s607 = scalar_select %p606, %s33, 1
          %s608 = scalar_lea.vmem %s13, %s607
        $region80: #{tpu_custom_call.1} parent=47 // pred_fallthru
          _
        // Predicated region
        $region81: #{tpu_custom_call.1} parent=47 // pred_check
          %p609 = pneg %p401
        $region82: #{tpu_custom_call.1} parent=47 // pred_check_branch
          %611 = sbr.rel (%p609) target = $region84
        $region83: #{tpu_custom_call.1} parent=47 // pred_region
          %p612 = scmp.lt.s32.totalorder %s33, 1
          %s613 = scalar_select %p612, %s33, 1
          %s614 = smul.addr %s613, 24
          %s615 = smul.addr %s614, 8
          %s616 = scalar_lea.vmem %s14, %s615
        $region84: #{tpu_custom_call.1} parent=47 // pred_fallthru
          _
        // Predicated region
        $region85: #{tpu_custom_call.1} parent=47 // pred_check
          %p617 = pneg %p427
        $region86: #{tpu_custom_call.1} parent=47 // pred_check_branch
          %619 = sbr.rel (%p617) target = $region88
        $region87: #{tpu_custom_call.1} parent=47 // pred_region
          %p620 = scmp.lt.s32.totalorder %s33, 1
          %s621 = scalar_select %p620, %s33, 1
          %s622 = scalar_lea.vmem %s15, %s621
        $region88: #{tpu_custom_call.1} parent=47 // pred_fallthru
          _
      $region48: #{tpu_custom_call.1} parent=5 // pred_fallthru
        _
      %p623 = scmp.le.s32.totalorder 1, %s25
      %p624 = scmp.lt.s32.totalorder %s25, 3
      %p625 = pnand %p623, %p624
      %p626 = pneg %p625
      // Predicated region
      $region89: #{tpu_custom_call.1} parent=5 // pred_check
        _
      $region90: #{tpu_custom_call.1} parent=5 // pred_check_branch
        %628 = sbr.rel (%p625) target = $region92
      $region91: #{tpu_custom_call.1} parent=5 // pred_region
        %s629 = ssub.s32 %s25, 1
        %s630 = smul.u32 2, %s34
        %p631 = scmp.lt.s32.totalorder %s630, 1
        %s632 = scalar_select %p631, %s630, 1
        %s633 = smul.addr %s632, 8
        %s634 = scalar_lea.vmem %s0, %s633
        %p635 = pneg %p63
        %p636 = pneg %p60
        %s637 = smul.u32 2, %s34
        %p638 = scmp.lt.s32.totalorder %s637, 1
        %s639 = scalar_select %p638, %s637, 1
        %s640 = scalar_lea.vmem %s1, %s639
        %p641 = pneg %p89
        %p642 = pneg %p86
        %p643 = pneg %p110
        %p644 = pneg %p107
        %p645 = pneg %p131
        %p646 = pneg %p128
        %p647 = pneg %p152
        %p648 = pneg %p149
        %p649 = pneg %p173
        %p650 = pneg %p170
        %p651 = scmp.lt.s32.totalorder %s35, 1
        %s652 = scalar_select %p651, %s35, 1
        %s653 = scalar_lea.vmem %s6, %s652
        %p654 = pneg %p199
        %p655 = pneg %p196
        %p656 = scmp.lt.s32.totalorder %s35, 1
        %s657 = scalar_select %p656, %s35, 1
        %s658 = scalar_lea.vmem %s7, %s657
        %p659 = pneg %p225
        %p660 = pneg %p222
        %p661 = scmp.lt.s32.totalorder %s35, 1
        %s662 = scalar_select %p661, %s35, 1
        %s663 = smul.addr %s662, 4
        %s664 = smul.addr %s663, 8
        %s665 = scalar_lea.vmem %s8, %s664
        %p666 = pneg %p251
        %p667 = pneg %p248
        %p668 = scmp.lt.s32.totalorder %s35, 1
        %s669 = scalar_select %p668, %s35, 1
        %s670 = smul.addr %s669, 4
        %s671 = smul.addr %s670, 8
        %s672 = scalar_lea.vmem %s9, %s671
        %p673 = pneg %p277
        %p674 = pneg %p274
        %p675 = scmp.lt.s32.totalorder %s35, 1
        %s676 = scalar_select %p675, %s35, 1
        %s677 = scalar_lea.vmem %s10, %s676
        %p678 = pneg %p303
        %p679 = pneg %p300
        %p680 = scmp.lt.s32.totalorder %s35, 1
        %s681 = scalar_select %p680, %s35, 1
        %s682 = scalar_lea.vmem %s11, %s681
        %p683 = pneg %p329
        %p684 = pneg %p326
        %p685 = scmp.lt.s32.totalorder %s35, 1
        %s686 = scalar_select %p685, %s35, 1
        %s687 = smul.addr %s686, 12
        %s688 = smul.addr %s687, 8
        %s689 = scalar_lea.vmem %s12, %s688
        %p690 = pneg %p355
        %p691 = pneg %p352
        %p692 = scmp.lt.s32.totalorder %s35, 1
        %s693 = scalar_select %p692, %s35, 1
        %s694 = scalar_lea.vmem %s13, %s693
        %p695 = pneg %p381
        %p696 = pneg %p378
        %p697 = scmp.lt.s32.totalorder %s35, 1
        %s698 = scalar_select %p697, %s35, 1
        %s699 = smul.addr %s698, 24
        %s700 = smul.addr %s699, 8
        %s701 = scalar_lea.vmem %s14, %s700
        %p702 = pneg %p407
        %p703 = pneg %p404
        %p704 = scmp.lt.s32.totalorder %s35, 1
        %s705 = scalar_select %p704, %s35, 1
        %s706 = scalar_lea.vmem %s15, %s705
        %p707 = pneg %p433
        %p708 = pneg %p430
        %p709 = pneg %p454
        %p710 = pneg %p451
        %p711 = pneg %p475
        %p712 = pneg %p472
        %p713 = pneg %p501
        %p714 = pneg %p498
        %s715 = smul.u32 2, %s34
        %p716 = scmp.lt.s32.totalorder %s715, 1
        %s717 = scalar_select %p716, %s715, 1
        %s718 = smul.addr %s717, 8
        %s719 = scalar_lea.vmem %s0, %s718
        %s720 = smul.u32 2, %s34
        %s721 = smul.u32 2, %s34
        %p722 = scmp.lt.s32.totalorder %s721, 1
        %s723 = scalar_select %p722, %s721, 1
        %s724 = scalar_lea.vmem %s1, %s723
        %s725 = smul.u32 2, %s34
        %p726 = scmp.lt.s32.totalorder %s35, 1
        %s727 = scalar_select %p726, %s35, 1
        %s728 = scalar_lea.vmem %s6, %s727
        %p729 = scmp.lt.s32.totalorder %s35, 1
        %s730 = scalar_select %p729, %s35, 1
        %s731 = scalar_lea.vmem %s7, %s730
        %p732 = scmp.lt.s32.totalorder %s35, 1
        %s733 = scalar_select %p732, %s35, 1
        %s734 = smul.addr %s733, 4
        %s735 = smul.addr %s734, 8
        %s736 = scalar_lea.vmem %s8, %s735
        %p737 = scmp.lt.s32.totalorder %s35, 1
        %s738 = scalar_select %p737, %s35, 1
        %s739 = smul.addr %s738, 4
        %s740 = smul.addr %s739, 8
        %s741 = scalar_lea.vmem %s9, %s740
        %p742 = scmp.lt.s32.totalorder %s35, 1
        %s743 = scalar_select %p742, %s35, 1
        %s744 = scalar_lea.vmem %s10, %s743
        %p745 = scmp.lt.s32.totalorder %s35, 1
        %s746 = scalar_select %p745, %s35, 1
        %s747 = scalar_lea.vmem %s11, %s746
        %p748 = scmp.lt.s32.totalorder %s35, 1
        %s749 = scalar_select %p748, %s35, 1
        %s750 = smul.addr %s749, 12
        %s751 = smul.addr %s750, 8
        %s752 = scalar_lea.vmem %s12, %s751
        %p753 = scmp.lt.s32.totalorder %s35, 1
        %s754 = scalar_select %p753, %s35, 1
        %s755 = scalar_lea.vmem %s13, %s754
        %p756 = scmp.lt.s32.totalorder %s35, 1
        %s757 = scalar_select %p756, %s35, 1
        %s758 = smul.addr %s757, 24
        %s759 = smul.addr %s758, 8
        %s760 = scalar_lea.vmem %s14, %s759
        %p761 = scmp.lt.s32.totalorder %s35, 1
        %s762 = scalar_select %p761, %s35, 1
        %s763 = scalar_lea.vmem %s15, %s762
        %s764 = smul.u32 2, %s34
        %p765 = scmp.eq.s32.totalorder %s35, 0
        // Predicated region
        $region93: #{tpu_custom_call.1} parent=91 // pred_check
          %p766 = pneg %p765
        $region94: #{tpu_custom_call.1} parent=91 // pred_check_branch
          %768 = sbr.rel (%p766) target = $region96
        $region95: #{tpu_custom_call.1} parent=91 // pred_region
          %v769 = vld [vmem:[%s719] sm:$0xff]
          %v770 = vld [vmem:[%s719 + $0x8] sm:$0xff]
          %v771 = vld [vmem:[%s5] sm:$0xff]
          %v772 = vld [vmem:[%s5 + $0x8] sm:$0xff]
          %v773 = vld [vmem:[%s5 + $0x10] sm:$0xff]
          %v774 = vld [vmem:[%s5 + $0x18] sm:$0xff]
          %vm775 = vcmask 261120
          %v777 = vsel %vm775, %v769, 0
          %v780 = vsel %vm775, %v770, 0
          %782 = vmatprep.subr.mxu0 0.0
          %783 = vmatpush1.msra.mxu0 %v771
          %784 = vmatprep.subr.mxu0 0.0
          %785 = vmatpush1.msra.mxu0 %v772
          %786 = vmatprep.subr.mxu0 0.0
          %787 = vmatpush1.msra.mxu0 %v773
          %788 = vmatprep.subr.mxu0 0.0
          %789 = vmatpush1.msra.mxu0 %v774
          %790 = vmatprep.subr.mxu0 0.0
          %791 = vmatpush1.msra.mxu0 0.0
          %792 = vmatprep.subr.mxu0 0.0
          %793 = vmatpush1.msra.mxu0 0.0
          %794 = vmatprep.subr.mxu0 0.0
          %795 = vmatpush1.msra.mxu0 0.0
          %796 = vmatprep.subr.mxu0 0.0
          %797 = vmatpush1.msra.mxu0 0.0
          %798 = vmatprep.subr.mxu0 0.0
          %799 = vmatpush1.msra.mxu0 0.0
          %800 = vmatprep.subr.mxu0 0.0
          %801 = vmatpush1.msra.mxu0 0.0
          %802 = vmatprep.subr.mxu0 0.0
          %803 = vmatpush1.msra.mxu0 0.0
          %804 = vmatprep.subr.mxu0 0.0
          %805 = vmatpush1.msra.mxu0 0.0
          %806 = vmatprep.subr.mxu0 0.0
          %807 = vmatpush1.msra.mxu0 0.0
          %808 = vmatprep.subr.mxu0 0.0
          %809 = vmatpush1.msra.mxu0 0.0
          %810 = vmatprep.subr.mxu0 0.0
          %811 = vmatpush1.msra.mxu0 0.0
          %812 = vmatprep.subr.mxu0 0.0
          %813 = vmatpush1.msra.mxu0 0.0
          %814 = vmatprep.subr.mxu0 0.0
          %815 = vmatpush1.msra.mxu0 0.0
          %816 = vmatprep.subr.mxu0 0.0
          %817 = vmatpush1.msra.mxu0 0.0
          %818 = vmatprep.subr.mxu0 0.0
          %819 = vmatpush1.msra.mxu0 0.0
          %820 = vmatprep.subr.mxu0 0.0
          %821 = vmatpush1.msra.mxu0 0.0
          %822 = vmatprep.subr.mxu0 0.0
          %823 = vmatpush1.msra.mxu0 0.0
          %824 = vmatprep.subr.mxu0 0.0
          %825 = vmatpush1.msra.mxu0 0.0
          %826 = vmatprep.subr.mxu0 0.0
          %827 = vmatpush1.msra.mxu0 0.0
          %828 = vmatprep.subr.mxu0 0.0
          %829 = vmatpush1.msra.mxu0 0.0
          %830 = vmatprep.subr.mxu0 0.0
          %831 = vmatpush1.msra.mxu0 0.0
          %832 = vmatprep.subr.mxu0 0.0
          %833 = vmatpush1.msra.mxu0 0.0
          %834 = vmatprep.subr.mxu0 0.0
          %835 = vmatpush1.msra.mxu0 0.0
          %836 = vmatprep.subr.mxu0 0.0
          %837 = vmatpush1.msra.mxu0 0.0
          %838 = vmatprep.subr.mxu0 0.0
          %839 = vmatpush1.msra.mxu0 0.0
          %840 = vmatprep.subr.mxu0 0.0
          %841 = vmatpush1.msra.mxu0 0.0
          %842 = vmatprep.subr.mxu0 0.0
          %843 = vmatpush1.msra.mxu0 0.0
          %844 = vmatprep.subr.mxu0 0.0
          %845 = vmatpush1.msra.mxu0 0.0
          %846 = vmatprep.mubr.f32.mxu0 0.0
          %847 = vmatmul.mubr.f32.gmra.mrb[0].mxu0 %v777
          %v848 = vpop.f32.mrb[0].mxu0
          %v849 = vadd.f32 0.0, %v848
          %v850 = vpop.f32.mrb[0].mxu0
          %851 = vmatprep.mubr.f32.mxu0 0.0
          %852 = vmatmul.mubr.f32.gmra.mrb[0].mxu0 %v780
          %v853 = vpop.f32.mrb[0].mxu0
          %v854 = vadd.f32 0.0, %v853
          %v855 = vpop.f32.mrb[0].mxu0
          %856 = vdwg.mxu0
          %v857 = vld [vmem:[%s2] sm:$0xff]
          %v858 = vadd.f32 %v849, %v857
          %v859 = vadd.f32 %v854, %v857
          %860 = vst.msk [vmem:[#allocation2] sm:$0xff] %vm775, %v858
          %861 = vst.msk [vmem:[#allocation2 + $0x8] sm:$0xff] %vm775, %v859
        $region96: #{tpu_custom_call.1} parent=91 // pred_fallthru
          _
        %v862 = vld [vmem:[#allocation2] sm:$0xff]
        %v863 = vld [vmem:[#allocation2 + $0x8] sm:$0xff]
        %v864 = vld [vmem:[%s724] sm:$0x1]
        %v865 = vld [vmem:[%s724 + $0x1] sm:$0x1]
        %vm866 = vcmp.gt.f32.partialorder %v864, 0.5
        %vm867 = vcmp.gt.f32.partialorder %v865, 0.5
        %v868 = vsel %vm866, -1e+18, 0.0
        %v869 = vsel %vm867, -1e+18, 0.0
        %v870 = vld [vmem:[%s728] sm:$0x1]
        %v871 = vld [vmem:[%s731] sm:$0x1]
        %vm872 = vcmask 261120
        %v873 = vsel %vm872, %v862, 0.0
        %874 = vadd.xlane.f32.xlu0 %v873
        %v875 = vpop.xlane.xlu0 %874
        %v876 = vsel %vm872, %v863, 0.0
        %877 = vadd.xlane.f32.xlu0 %v876
        %v878 = vpop.xlane.xlu0 %877
        %v879 = vrcp.pop 32.0
        %v880 = vmul.f32 %v875, %v879
        %v881 = vmul.f32 %v878, %v879
        %v882 = vsub.f32 %v862, %v880
        %v883 = vsub.f32 %v863, %v881
        %v884 = vmul.f32 %v882, %v882
        %v885 = vmul.f32 %v883, %v883
        %v886 = vsel %vm872, %v884, 0.0
        %887 = vadd.xlane.f32.xlu0 %v886
        %v888 = vpop.xlane.xlu0 %887
        %v889 = vsel %vm872, %v885, 0.0
        %890 = vadd.xlane.f32.xlu0 %v889
        %v891 = vpop.xlane.xlu0 %890
        %v892 = vmul.f32 %v888, 0.032258064
        %v893 = vmul.f32 %v891, 0.032258064
        %v894 = vrsqrt.pop %v892
        %v895 = vmul.f32 %v892, %v894
        %vm896 = vcmp.eq.f32.partialorder %v892, inf
        %v897 = vsel %vm896, %v892, %v895
        %vm898 = vcmp.eq.f32.partialorder %v892, 0.0
        %v899 = vand.u32 %v892, 2147483648
        %v900 = vsel %vm898, %v899, %v897
        %v901 = vrsqrt.pop %v893
        %v902 = vmul.f32 %v893, %v901
        %vm903 = vcmp.eq.f32.partialorder %v893, inf
        %v904 = vsel %vm903, %v893, %v902
        %vm905 = vcmp.eq.f32.partialorder %v893, 0.0
        %v906 = vand.u32 %v893, 2147483648
        %v907 = vsel %vm905, %v906, %v904
        %v908 = vadd.f32 %v900, 1e-06
        %v909 = vadd.f32 %v907, 1e-06
        %v910 = vrcp.pop %v908
        %v911 = vmul.f32 %v882, %v910
        %v912 = vrcp.pop %v909
        %v913 = vmul.f32 %v883, %v912
        %v915 = vlaneseq
        %v916 = vshrl.u32 %v915, 7
        %v917 = vsub.s32 0, %v916
        %v918 = vrot.slane %v870, %v917
        %v920 = vmul.f32 %v918, %v911
        %v921 = vmul.f32 %v918, %v913
        %v923 = vlaneseq
        %v924 = vshrl.u32 %v923, 7
        %v925 = vsub.s32 0, %v924
        %v926 = vrot.slane %v871, %v925
        %v928 = vadd.f32 %v920, %v926
        %v929 = vadd.f32 %v921, %v926
        %v930 = vld [vmem:[%s736] sm:$0xff]
        %v931 = vld [vmem:[%s736 + $0x8] sm:$0xff]
        %v932 = vld [vmem:[%s736 + $0x10] sm:$0xff]
        %v933 = vld [vmem:[%s736 + $0x18] sm:$0xff]
        %v935 = vsel %vm872, %v928, 0
        %v938 = vsel %vm872, %v929, 0
        %940 = vmatprep.subr.mxu0 0.0
        %941 = vmatpush1.msra.mxu0 %v930
        %942 = vmatprep.subr.mxu0 0.0
        %943 = vmatpush1.msra.mxu0 %v931
        %944 = vmatprep.subr.mxu0 0.0
        %945 = vmatpush1.msra.mxu0 %v932
        %946 = vmatprep.subr.mxu0 0.0
        %947 = vmatpush1.msra.mxu0 %v933
        %948 = vmatprep.subr.mxu0 0.0
        %949 = vmatpush1.msra.mxu0 0.0
        %950 = vmatprep.subr.mxu0 0.0
        %951 = vmatpush1.msra.mxu0 0.0
        %952 = vmatprep.subr.mxu0 0.0
        %953 = vmatpush1.msra.mxu0 0.0
        %954 = vmatprep.subr.mxu0 0.0
        %955 = vmatpush1.msra.mxu0 0.0
        %956 = vmatprep.subr.mxu0 0.0
        %957 = vmatpush1.msra.mxu0 0.0
        %958 = vmatprep.subr.mxu0 0.0
        %959 = vmatpush1.msra.mxu0 0.0
        %960 = vmatprep.subr.mxu0 0.0
        %961 = vmatpush1.msra.mxu0 0.0
        %962 = vmatprep.subr.mxu0 0.0
        %963 = vmatpush1.msra.mxu0 0.0
        %964 = vmatprep.subr.mxu0 0.0
        %965 = vmatpush1.msra.mxu0 0.0
        %966 = vmatprep.subr.mxu0 0.0
        %967 = vmatpush1.msra.mxu0 0.0
        %968 = vmatprep.subr.mxu0 0.0
        %969 = vmatpush1.msra.mxu0 0.0
        %970 = vmatprep.subr.mxu0 0.0
        %971 = vmatpush1.msra.mxu0 0.0
        %972 = vmatprep.subr.mxu0 0.0
        %973 = vmatpush1.msra.mxu0 0.0
        %974 = vmatprep.subr.mxu0 0.0
        %975 = vmatpush1.msra.mxu0 0.0
        %976 = vmatprep.subr.mxu0 0.0
        %977 = vmatpush1.msra.mxu0 0.0
        %978 = vmatprep.subr.mxu0 0.0
        %979 = vmatpush1.msra.mxu0 0.0
        %980 = vmatprep.subr.mxu0 0.0
        %981 = vmatpush1.msra.mxu0 0.0
        %982 = vmatprep.subr.mxu0 0.0
        %983 = vmatpush1.msra.mxu0 0.0
        %984 = vmatprep.subr.mxu0 0.0
        %985 = vmatpush1.msra.mxu0 0.0
        %986 = vmatprep.subr.mxu0 0.0
        %987 = vmatpush1.msra.mxu0 0.0
        %988 = vmatprep.subr.mxu0 0.0
        %989 = vmatpush1.msra.mxu0 0.0
        %990 = vmatprep.subr.mxu0 0.0
        %991 = vmatpush1.msra.mxu0 0.0
        %992 = vmatprep.subr.mxu0 0.0
        %993 = vmatpush1.msra.mxu0 0.0
        %994 = vmatprep.subr.mxu0 0.0
        %995 = vmatpush1.msra.mxu0 0.0
        %996 = vmatprep.subr.mxu0 0.0
        %997 = vmatpush1.msra.mxu0 0.0
        %998 = vmatprep.subr.mxu0 0.0
        %999 = vmatpush1.msra.mxu0 0.0
        %1000 = vmatprep.subr.mxu0 0.0
        %1001 = vmatpush1.msra.mxu0 0.0
        %1002 = vmatprep.subr.mxu0 0.0
        %1003 = vmatpush1.msra.mxu0 0.0
        %1004 = vmatprep.mubr.f32.mxu0 0.0
        %1005 = vmatmul.mubr.f32.gmra.mrb[0].mxu0 %v935
        %v1006 = vpop.f32.mrb[0].mxu0
        %v1007 = vadd.f32 0.0, %v1006
        %v1008 = vpop.f32.mrb[0].mxu0
        %1009 = vmatprep.mubr.f32.mxu0 0.0
        %1010 = vmatmul.mubr.f32.gmra.mrb[0].mxu0 %v938
        %v1011 = vpop.f32.mrb[0].mxu0
        %v1012 = vadd.f32 0.0, %v1011
        %v1013 = vpop.f32.mrb[0].mxu0
        %1014 = vdwg.mxu0
        %v1017 = vlaneseq
        %v1018 = vshrl.u32 %v1017, 7
        %v1019 = vsub.s32 0, %v1018
        %v1020 = vrot.slane %v868, %v1019
        %v1021 = vlaneseq
        %v1022 = vshrl.u32 %v1021, 7
        %v1023 = vsub.s32 0, %v1022
        %v1024 = vrot.slane %v869, %v1023
        %1028 = vrot.lane.b32.xlu0 %v1007, 96
        %v1029 = vpop.permute.xlu0 %1028
        %vm1030 = vcmask 130048
        %v1031 = vsel %vm1030, %v1007, 0
        %v1033 = vsel %vm1030, %v1029, 0
        %1035 = vmatprep.subr.mxu0 0.0
        %1036 = vmatpush1.xpose.msra.mxu0 %v1033
        %1037 = vmatprep.subr.mxu0 0.0
        %1038 = vmatpush1.xpose.msra.mxu0 0.0
        %1039 = vmatprep.subr.mxu0 0.0
        %1040 = vmatpush1.xpose.msra.mxu0 0.0
        %1041 = vmatprep.subr.mxu0 0.0
        %1042 = vmatpush1.xpose.msra.mxu0 0.0
        %1043 = vmatprep.subr.mxu0 0.0
        %1044 = vmatpush1.xpose.msra.mxu0 0.0
        %1045 = vmatprep.subr.mxu0 0.0
        %1046 = vmatpush1.xpose.msra.mxu0 0.0
        %1047 = vmatprep.subr.mxu0 0.0
        %1048 = vmatpush1.xpose.msra.mxu0 0.0
        %1049 = vmatprep.subr.mxu0 0.0
        %1050 = vmatpush1.xpose.msra.mxu0 0.0
        %1051 = vmatprep.subr.mxu0 0.0
        %1052 = vmatpush1.xpose.msra.mxu0 0.0
        %1053 = vmatprep.subr.mxu0 0.0
        %1054 = vmatpush1.xpose.msra.mxu0 0.0
        %1055 = vmatprep.subr.mxu0 0.0
        %1056 = vmatpush1.xpose.msra.mxu0 0.0
        %1057 = vmatprep.subr.mxu0 0.0
        %1058 = vmatpush1.xpose.msra.mxu0 0.0
        %1059 = vmatprep.subr.mxu0 0.0
        %1060 = vmatpush1.xpose.msra.mxu0 0.0
        %1061 = vmatprep.subr.mxu0 0.0
        %1062 = vmatpush1.xpose.msra.mxu0 0.0
        %1063 = vmatprep.subr.mxu0 0.0
        %1064 = vmatpush1.xpose.msra.mxu0 0.0
        %1065 = vmatprep.subr.mxu0 0.0
        %1066 = vmatpush1.xpose.msra.mxu0 0.0
        %1067 = vmatprep.subr.mxu0 0.0
        %1068 = vmatpush1.xpose.msra.mxu0 0.0
        %1069 = vmatprep.subr.mxu0 0.0
        %1070 = vmatpush1.xpose.msra.mxu0 0.0
        %1071 = vmatprep.subr.mxu0 0.0
        %1072 = vmatpush1.xpose.msra.mxu0 0.0
        %1073 = vmatprep.subr.mxu0 0.0
        %1074 = vmatpush1.xpose.msra.mxu0 0.0
        %1075 = vmatprep.subr.mxu0 0.0
        %1076 = vmatpush1.xpose.msra.mxu0 0.0
        %1077 = vmatprep.subr.mxu0 0.0
        %1078 = vmatpush1.xpose.msra.mxu0 0.0
        %1079 = vmatprep.subr.mxu0 0.0
        %1080 = vmatpush1.xpose.msra.mxu0 0.0
        %1081 = vmatprep.subr.mxu0 0.0
        %1082 = vmatpush1.xpose.msra.mxu0 0.0
        %1083 = vmatprep.subr.mxu0 0.0
        %1084 = vmatpush1.xpose.msra.mxu0 0.0
        %1085 = vmatprep.subr.mxu0 0.0
        %1086 = vmatpush1.xpose.msra.mxu0 0.0
        %1087 = vmatprep.subr.mxu0 0.0
        %1088 = vmatpush1.xpose.msra.mxu0 0.0
        %1089 = vmatprep.subr.mxu0 0.0
        %1090 = vmatpush1.xpose.msra.mxu0 0.0
        %1091 = vmatprep.subr.mxu0 0.0
        %1092 = vmatpush1.xpose.msra.mxu0 0.0
        %1093 = vmatprep.subr.mxu0 0.0
        %1094 = vmatpush1.xpose.msra.mxu0 0.0
        %1095 = vmatprep.subr.mxu0 0.0
        %1096 = vmatpush1.xpose.msra.mxu0 0.0
        %1097 = vmatprep.subr.mxu0 0.0
        %1098 = vmatpush1.xpose.msra.mxu0 0.0
        %1099 = vmatprep.mubr.f32.mxu0 0.0
        %1100 = vmatmul.mubr.f32.gmra.mrb[0].mxu0 %v1031
        %v1101 = vpop.f32.mrb[0].mxu0
        %v1102 = vadd.f32 %v1020, %v1101
        %v1103 = vpop.f32.mrb[0].mxu0
        %1104 = vdwg.mxu0
        %1106 = vrot.lane.b32.xlu0 %v1012, 96
        %v1107 = vpop.permute.xlu0 %1106
        %v1108 = vsel %vm1030, %v1012, 0
        %v1110 = vsel %vm1030, %v1107, 0
        %1112 = vmatprep.subr.mxu0 0.0
        %1113 = vmatpush1.xpose.msra.mxu0 %v1110
        %1114 = vmatprep.subr.mxu0 0.0
        %1115 = vmatpush1.xpose.msra.mxu0 0.0
        %1116 = vmatprep.subr.mxu0 0.0
        %1117 = vmatpush1.xpose.msra.mxu0 0.0
        %1118 = vmatprep.subr.mxu0 0.0
        %1119 = vmatpush1.xpose.msra.mxu0 0.0
        %1120 = vmatprep.subr.mxu0 0.0
        %1121 = vmatpush1.xpose.msra.mxu0 0.0
        %1122 = vmatprep.subr.mxu0 0.0
        %1123 = vmatpush1.xpose.msra.mxu0 0.0
        %1124 = vmatprep.subr.mxu0 0.0
        %1125 = vmatpush1.xpose.msra.mxu0 0.0
        %1126 = vmatprep.subr.mxu0 0.0
        %1127 = vmatpush1.xpose.msra.mxu0 0.0
        %1128 = vmatprep.subr.mxu0 0.0
        %1129 = vmatpush1.xpose.msra.mxu0 0.0
        %1130 = vmatprep.subr.mxu0 0.0
        %1131 = vmatpush1.xpose.msra.mxu0 0.0
        %1132 = vmatprep.subr.mxu0 0.0
        %1133 = vmatpush1.xpose.msra.mxu0 0.0
        %1134 = vmatprep.subr.mxu0 0.0
        %1135 = vmatpush1.xpose.msra.mxu0 0.0
        %1136 = vmatprep.subr.mxu0 0.0
        %1137 = vmatpush1.xpose.msra.mxu0 0.0
        %1138 = vmatprep.subr.mxu0 0.0
        %1139 = vmatpush1.xpose.msra.mxu0 0.0
        %1140 = vmatprep.subr.mxu0 0.0
        %1141 = vmatpush1.xpose.msra.mxu0 0.0
        %1142 = vmatprep.subr.mxu0 0.0
        %1143 = vmatpush1.xpose.msra.mxu0 0.0
        %1144 = vmatprep.subr.mxu0 0.0
        %1145 = vmatpush1.xpose.msra.mxu0 0.0
        %1146 = vmatprep.subr.mxu0 0.0
        %1147 = vmatpush1.xpose.msra.mxu0 0.0
        %1148 = vmatprep.subr.mxu0 0.0
        %1149 = vmatpush1.xpose.msra.mxu0 0.0
        %1150 = vmatprep.subr.mxu0 0.0
        %1151 = vmatpush1.xpose.msra.mxu0 0.0
        %1152 = vmatprep.subr.mxu0 0.0
        %1153 = vmatpush1.xpose.msra.mxu0 0.0
        %1154 = vmatprep.subr.mxu0 0.0
        %1155 = vmatpush1.xpose.msra.mxu0 0.0
        %1156 = vmatprep.subr.mxu0 0.0
        %1157 = vmatpush1.xpose.msra.mxu0 0.0
        %1158 = vmatprep.subr.mxu0 0.0
        %1159 = vmatpush1.xpose.msra.mxu0 0.0
        %1160 = vmatprep.subr.mxu0 0.0
        %1161 = vmatpush1.xpose.msra.mxu0 0.0
        %1162 = vmatprep.subr.mxu0 0.0
        %1163 = vmatpush1.xpose.msra.mxu0 0.0
        %1164 = vmatprep.subr.mxu0 0.0
        %1165 = vmatpush1.xpose.msra.mxu0 0.0
        %1166 = vmatprep.subr.mxu0 0.0
        %1167 = vmatpush1.xpose.msra.mxu0 0.0
        %1168 = vmatprep.subr.mxu0 0.0
        %1169 = vmatpush1.xpose.msra.mxu0 0.0
        %1170 = vmatprep.subr.mxu0 0.0
        %1171 = vmatpush1.xpose.msra.mxu0 0.0
        %1172 = vmatprep.subr.mxu0 0.0
        %1173 = vmatpush1.xpose.msra.mxu0 0.0
        %1174 = vmatprep.subr.mxu0 0.0
        %1175 = vmatpush1.xpose.msra.mxu0 0.0
        %1176 = vmatprep.mubr.f32.mxu0 0.0
        %1177 = vmatmul.mubr.f32.gmra.mrb[0].mxu0 %v1108
        %v1178 = vpop.f32.mrb[0].mxu0
        %v1179 = vadd.f32 %v1024, %v1178
        %v1180 = vpop.f32.mrb[0].mxu0
        %1181 = vdwg.mxu0
        %vm1182 = vcmask 64512
        %v1183 = vsel %vm1182, %v1102, -inf
        %1184 = vmax.xlane.f32.xlu0 %v1183
        %v1185 = vpop.xlane.xlu0 %1184
        %v1186 = vsel %vm1182, %v1179, -inf
        %1187 = vmax.xlane.f32.xlu0 %v1186
        %v1188 = vpop.xlane.xlu0 %1187
        %v1189 = vsub.f32 %v1102, %v1185
        %v1190 = vsub.f32 %v1179, %v1188
        %v1191 = vmul.f32 %v1189, 1.442695
        %v1192 = vpow.pop %v1191
        %v1193 = vmul.f32 %v1190, 1.442695
        %v1194 = vpow.pop %v1193
        %v1195 = vsel %vm1182, %v1192, 0.0
        %1196 = vadd.xlane.f32.xlu0 %v1195
        %v1197 = vpop.xlane.xlu0 %1196
        %v1198 = vsel %vm1182, %v1194, 0.0
        %1199 = vadd.xlane.f32.xlu0 %v1198
        %v1200 = vpop.xlane.xlu0 %1199
        %v1201 = vrcp.pop %v1197
        %v1202 = vrcp.pop %v1200
        %v1203 = vmul.f32 %v1192, %v1201
        %v1204 = vmul.f32 %v1194, %v1202
        %1205 = vrot.lane.b32.xlu0 %v1007, 64
        %v1206 = vpop.permute.xlu0 %1205
        %v1209 = vsel %vm1182, %v1203, 0
        %1211 = vmatprep.subr.mxu0 0.0
        %1212 = vmatpush1.msra.mxu0 %v1206
        %1213 = vmatprep.subr.mxu0 0.0
        %1214 = vmatpush1.msra.mxu0 0.0
        %1215 = vmatprep.subr.mxu0 0.0
        %1216 = vmatpush1.msra.mxu0 0.0
        %1217 = vmatprep.subr.mxu0 0.0
        %1218 = vmatpush1.msra.mxu0 0.0
        %1219 = vmatprep.subr.mxu0 0.0
        %1220 = vmatpush1.msra.mxu0 0.0
        %1221 = vmatprep.subr.mxu0 0.0
        %1222 = vmatpush1.msra.mxu0 0.0
        %1223 = vmatprep.subr.mxu0 0.0
        %1224 = vmatpush1.msra.mxu0 0.0
        %1225 = vmatprep.subr.mxu0 0.0
        %1226 = vmatpush1.msra.mxu0 0.0
        %1227 = vmatprep.subr.mxu0 0.0
        %1228 = vmatpush1.msra.mxu0 0.0
        %1229 = vmatprep.subr.mxu0 0.0
        %1230 = vmatpush1.msra.mxu0 0.0
        %1231 = vmatprep.subr.mxu0 0.0
        %1232 = vmatpush1.msra.mxu0 0.0
        %1233 = vmatprep.subr.mxu0 0.0
        %1234 = vmatpush1.msra.mxu0 0.0
        %1235 = vmatprep.subr.mxu0 0.0
        %1236 = vmatpush1.msra.mxu0 0.0
        %1237 = vmatprep.subr.mxu0 0.0
        %1238 = vmatpush1.msra.mxu0 0.0
        %1239 = vmatprep.subr.mxu0 0.0
        %1240 = vmatpush1.msra.mxu0 0.0
        %1241 = vmatprep.subr.mxu0 0.0
        %1242 = vmatpush1.msra.mxu0 0.0
        %1243 = vmatprep.subr.mxu0 0.0
        %1244 = vmatpush1.msra.mxu0 0.0
        %1245 = vmatprep.subr.mxu0 0.0
        %1246 = vmatpush1.msra.mxu0 0.0
        %1247 = vmatprep.subr.mxu0 0.0
        %1248 = vmatpush1.msra.mxu0 0.0
        %1249 = vmatprep.subr.mxu0 0.0
        %1250 = vmatpush1.msra.mxu0 0.0
        %1251 = vmatprep.subr.mxu0 0.0
        %1252 = vmatpush1.msra.mxu0 0.0
        %1253 = vmatprep.subr.mxu0 0.0
        %1254 = vmatpush1.msra.mxu0 0.0
        %1255 = vmatprep.subr.mxu0 0.0
        %1256 = vmatpush1.msra.mxu0 0.0
        %1257 = vmatprep.subr.mxu0 0.0
        %1258 = vmatpush1.msra.mxu0 0.0
        %1259 = vmatprep.subr.mxu0 0.0
        %1260 = vmatpush1.msra.mxu0 0.0
        %1261 = vmatprep.subr.mxu0 0.0
        %1262 = vmatpush1.msra.mxu0 0.0
        %1263 = vmatprep.subr.mxu0 0.0
        %1264 = vmatpush1.msra.mxu0 0.0
        %1265 = vmatprep.subr.mxu0 0.0
        %1266 = vmatpush1.msra.mxu0 0.0
        %1267 = vmatprep.subr.mxu0 0.0
        %1268 = vmatpush1.msra.mxu0 0.0
        %1269 = vmatprep.subr.mxu0 0.0
        %1270 = vmatpush1.msra.mxu0 0.0
        %1271 = vmatprep.subr.mxu0 0.0
        %1272 = vmatpush1.msra.mxu0 0.0
        %1273 = vmatprep.subr.mxu0 0.0
        %1274 = vmatpush1.msra.mxu0 0.0
        %1275 = vmatprep.mubr.f32.mxu0 0.0
        %1276 = vmatmul.mubr.f32.gmra.mrb[0].mxu0 %v1209
        %v1277 = vpop.f32.mrb[0].mxu0
        %v1278 = vadd.f32 0.0, %v1277
        %v1279 = vpop.f32.mrb[0].mxu0
        %1280 = vdwg.mxu0
        %1281 = vrot.lane.b32.xlu0 %v1012, 64
        %v1282 = vpop.permute.xlu0 %1281
        %v1285 = vsel %vm1182, %v1204, 0
        %1287 = vmatprep.subr.mxu0 0.0
        %1288 = vmatpush1.msra.mxu0 %v1282
        %1289 = vmatprep.subr.mxu0 0.0
        %1290 = vmatpush1.msra.mxu0 0.0
        %1291 = vmatprep.subr.mxu0 0.0
        %1292 = vmatpush1.msra.mxu0 0.0
        %1293 = vmatprep.subr.mxu0 0.0
        %1294 = vmatpush1.msra.mxu0 0.0
        %1295 = vmatprep.subr.mxu0 0.0
        %1296 = vmatpush1.msra.mxu0 0.0
        %1297 = vmatprep.subr.mxu0 0.0
        %1298 = vmatpush1.msra.mxu0 0.0
        %1299 = vmatprep.subr.mxu0 0.0
        %1300 = vmatpush1.msra.mxu0 0.0
        %1301 = vmatprep.subr.mxu0 0.0
        %1302 = vmatpush1.msra.mxu0 0.0
        %1303 = vmatprep.subr.mxu0 0.0
        %1304 = vmatpush1.msra.mxu0 0.0
        %1305 = vmatprep.subr.mxu0 0.0
        %1306 = vmatpush1.msra.mxu0 0.0
        %1307 = vmatprep.subr.mxu0 0.0
        %1308 = vmatpush1.msra.mxu0 0.0
        %1309 = vmatprep.subr.mxu0 0.0
        %1310 = vmatpush1.msra.mxu0 0.0
        %1311 = vmatprep.subr.mxu0 0.0
        %1312 = vmatpush1.msra.mxu0 0.0
        %1313 = vmatprep.subr.mxu0 0.0
        %1314 = vmatpush1.msra.mxu0 0.0
        %1315 = vmatprep.subr.mxu0 0.0
        %1316 = vmatpush1.msra.mxu0 0.0
        %1317 = vmatprep.subr.mxu0 0.0
        %1318 = vmatpush1.msra.mxu0 0.0
        %1319 = vmatprep.subr.mxu0 0.0
        %1320 = vmatpush1.msra.mxu0 0.0
        %1321 = vmatprep.subr.mxu0 0.0
        %1322 = vmatpush1.msra.mxu0 0.0
        %1323 = vmatprep.subr.mxu0 0.0
        %1324 = vmatpush1.msra.mxu0 0.0
        %1325 = vmatprep.subr.mxu0 0.0
        %1326 = vmatpush1.msra.mxu0 0.0
        %1327 = vmatprep.subr.mxu0 0.0
        %1328 = vmatpush1.msra.mxu0 0.0
        %1329 = vmatprep.subr.mxu0 0.0
        %1330 = vmatpush1.msra.mxu0 0.0
        %1331 = vmatprep.subr.mxu0 0.0
        %1332 = vmatpush1.msra.mxu0 0.0
        %1333 = vmatprep.subr.mxu0 0.0
        %1334 = vmatpush1.msra.mxu0 0.0
        %1335 = vmatprep.subr.mxu0 0.0
        %1336 = vmatpush1.msra.mxu0 0.0
        %1337 = vmatprep.subr.mxu0 0.0
        %1338 = vmatpush1.msra.mxu0 0.0
        %1339 = vmatprep.subr.mxu0 0.0
        %1340 = vmatpush1.msra.mxu0 0.0
        %1341 = vmatprep.subr.mxu0 0.0
        %1342 = vmatpush1.msra.mxu0 0.0
        %1343 = vmatprep.subr.mxu0 0.0
        %1344 = vmatpush1.msra.mxu0 0.0
        %1345 = vmatprep.subr.mxu0 0.0
        %1346 = vmatpush1.msra.mxu0 0.0
        %1347 = vmatprep.subr.mxu0 0.0
        %1348 = vmatpush1.msra.mxu0 0.0
        %1349 = vmatprep.subr.mxu0 0.0
        %1350 = vmatpush1.msra.mxu0 0.0
        %1351 = vmatprep.mubr.f32.mxu0 0.0
        %1352 = vmatmul.mubr.f32.gmra.mrb[0].mxu0 %v1285
        %v1353 = vpop.f32.mrb[0].mxu0
        %v1354 = vadd.f32 0.0, %v1353
        %v1355 = vpop.f32.mrb[0].mxu0
        %1356 = vdwg.mxu0
        %1357 = vrot.lane.b32.xlu0 %v1007, 112
        %v1358 = vpop.permute.xlu0 %1357
        %1359 = vrot.lane.b32.xlu0 %v1007, 80
        %v1360 = vpop.permute.xlu0 %1359
        %v1361 = vsel %vm1030, %v1358, 0
        %v1363 = vsel %vm1030, %v1360, 0
        %1365 = vmatprep.subr.mxu0 0.0
        %1366 = vmatpush1.xpose.msra.mxu0 %v1363
        %1367 = vmatprep.subr.mxu0 0.0
        %1368 = vmatpush1.xpose.msra.mxu0 0.0
        %1369 = vmatprep.subr.mxu0 0.0
        %1370 = vmatpush1.xpose.msra.mxu0 0.0
        %1371 = vmatprep.subr.mxu0 0.0
        %1372 = vmatpush1.xpose.msra.mxu0 0.0
        %1373 = vmatprep.subr.mxu0 0.0
        %1374 = vmatpush1.xpose.msra.mxu0 0.0
        %1375 = vmatprep.subr.mxu0 0.0
        %1376 = vmatpush1.xpose.msra.mxu0 0.0
        %1377 = vmatprep.subr.mxu0 0.0
        %1378 = vmatpush1.xpose.msra.mxu0 0.0
        %1379 = vmatprep.subr.mxu0 0.0
        %1380 = vmatpush1.xpose.msra.mxu0 0.0
        %1381 = vmatprep.subr.mxu0 0.0
        %1382 = vmatpush1.xpose.msra.mxu0 0.0
        %1383 = vmatprep.subr.mxu0 0.0
        %1384 = vmatpush1.xpose.msra.mxu0 0.0
        %1385 = vmatprep.subr.mxu0 0.0
        %1386 = vmatpush1.xpose.msra.mxu0 0.0
        %1387 = vmatprep.subr.mxu0 0.0
        %1388 = vmatpush1.xpose.msra.mxu0 0.0
        %1389 = vmatprep.subr.mxu0 0.0
        %1390 = vmatpush1.xpose.msra.mxu0 0.0
        %1391 = vmatprep.subr.mxu0 0.0
        %1392 = vmatpush1.xpose.msra.mxu0 0.0
        %1393 = vmatprep.subr.mxu0 0.0
        %1394 = vmatpush1.xpose.msra.mxu0 0.0
        %1395 = vmatprep.subr.mxu0 0.0
        %1396 = vmatpush1.xpose.msra.mxu0 0.0
        %1397 = vmatprep.subr.mxu0 0.0
        %1398 = vmatpush1.xpose.msra.mxu0 0.0
        %1399 = vmatprep.subr.mxu0 0.0
        %1400 = vmatpush1.xpose.msra.mxu0 0.0
        %1401 = vmatprep.subr.mxu0 0.0
        %1402 = vmatpush1.xpose.msra.mxu0 0.0
        %1403 = vmatprep.subr.mxu0 0.0
        %1404 = vmatpush1.xpose.msra.mxu0 0.0
        %1405 = vmatprep.subr.mxu0 0.0
        %1406 = vmatpush1.xpose.msra.mxu0 0.0
        %1407 = vmatprep.subr.mxu0 0.0
        %1408 = vmatpush1.xpose.msra.mxu0 0.0
        %1409 = vmatprep.subr.mxu0 0.0
        %1410 = vmatpush1.xpose.msra.mxu0 0.0
        %1411 = vmatprep.subr.mxu0 0.0
        %1412 = vmatpush1.xpose.msra.mxu0 0.0
        %1413 = vmatprep.subr.mxu0 0.0
        %1414 = vmatpush1.xpose.msra.mxu0 0.0
        %1415 = vmatprep.subr.mxu0 0.0
        %1416 = vmatpush1.xpose.msra.mxu0 0.0
        %1417 = vmatprep.subr.mxu0 0.0
        %1418 = vmatpush1.xpose.msra.mxu0 0.0
        %1419 = vmatprep.subr.mxu0 0.0
        %1420 = vmatpush1.xpose.msra.mxu0 0.0
        %1421 = vmatprep.subr.mxu0 0.0
        %1422 = vmatpush1.xpose.msra.mxu0 0.0
        %1423 = vmatprep.subr.mxu0 0.0
        %1424 = vmatpush1.xpose.msra.mxu0 0.0
        %1425 = vmatprep.subr.mxu0 0.0
        %1426 = vmatpush1.xpose.msra.mxu0 0.0
        %1427 = vmatprep.subr.mxu0 0.0
        %1428 = vmatpush1.xpose.msra.mxu0 0.0
        %1429 = vmatprep.mubr.f32.mxu0 0.0
        %1430 = vmatmul.mubr.f32.gmra.mrb[0].mxu0 %v1361
        %v1431 = vpop.f32.mrb[0].mxu0
        %v1432 = vadd.f32 %v1020, %v1431
        %v1433 = vpop.f32.mrb[0].mxu0
        %1434 = vdwg.mxu0
        %1435 = vrot.lane.b32.xlu0 %v1012, 112
        %v1436 = vpop.permute.xlu0 %1435
        %1437 = vrot.lane.b32.xlu0 %v1012, 80
        %v1438 = vpop.permute.xlu0 %1437
        %v1439 = vsel %vm1030, %v1436, 0
        %v1441 = vsel %vm1030, %v1438, 0
        %1443 = vmatprep.subr.mxu0 0.0
        %1444 = vmatpush1.xpose.msra.mxu0 %v1441
        %1445 = vmatprep.subr.mxu0 0.0
        %1446 = vmatpush1.xpose.msra.mxu0 0.0
        %1447 = vmatprep.subr.mxu0 0.0
        %1448 = vmatpush1.xpose.msra.mxu0 0.0
        %1449 = vmatprep.subr.mxu0 0.0
        %1450 = vmatpush1.xpose.msra.mxu0 0.0
        %1451 = vmatprep.subr.mxu0 0.0
        %1452 = vmatpush1.xpose.msra.mxu0 0.0
        %1453 = vmatprep.subr.mxu0 0.0
        %1454 = vmatpush1.xpose.msra.mxu0 0.0
        %1455 = vmatprep.subr.mxu0 0.0
        %1456 = vmatpush1.xpose.msra.mxu0 0.0
        %1457 = vmatprep.subr.mxu0 0.0
        %1458 = vmatpush1.xpose.msra.mxu0 0.0
        %1459 = vmatprep.subr.mxu0 0.0
        %1460 = vmatpush1.xpose.msra.mxu0 0.0
        %1461 = vmatprep.subr.mxu0 0.0
        %1462 = vmatpush1.xpose.msra.mxu0 0.0
        %1463 = vmatprep.subr.mxu0 0.0
        %1464 = vmatpush1.xpose.msra.mxu0 0.0
        %1465 = vmatprep.subr.mxu0 0.0
        %1466 = vmatpush1.xpose.msra.mxu0 0.0
        %1467 = vmatprep.subr.mxu0 0.0
        %1468 = vmatpush1.xpose.msra.mxu0 0.0
        %1469 = vmatprep.subr.mxu0 0.0
        %1470 = vmatpush1.xpose.msra.mxu0 0.0
        %1471 = vmatprep.subr.mxu0 0.0
        %1472 = vmatpush1.xpose.msra.mxu0 0.0
        %1473 = vmatprep.subr.mxu0 0.0
        %1474 = vmatpush1.xpose.msra.mxu0 0.0
        %1475 = vmatprep.subr.mxu0 0.0
        %1476 = vmatpush1.xpose.msra.mxu0 0.0
        %1477 = vmatprep.subr.mxu0 0.0
        %1478 = vmatpush1.xpose.msra.mxu0 0.0
        %1479 = vmatprep.subr.mxu0 0.0
        %1480 = vmatpush1.xpose.msra.mxu0 0.0
        %1481 = vmatprep.subr.mxu0 0.0
        %1482 = vmatpush1.xpose.msra.mxu0 0.0
        %1483 = vmatprep.subr.mxu0 0.0
        %1484 = vmatpush1.xpose.msra.mxu0 0.0
        %1485 = vmatprep.subr.mxu0 0.0
        %1486 = vmatpush1.xpose.msra.mxu0 0.0
        %1487 = vmatprep.subr.mxu0 0.0
        %1488 = vmatpush1.xpose.msra.mxu0 0.0
        %1489 = vmatprep.subr.mxu0 0.0
        %1490 = vmatpush1.xpose.msra.mxu0 0.0
        %1491 = vmatprep.subr.mxu0 0.0
        %1492 = vmatpush1.xpose.msra.mxu0 0.0
        %1493 = vmatprep.subr.mxu0 0.0
        %1494 = vmatpush1.xpose.msra.mxu0 0.0
        %1495 = vmatprep.subr.mxu0 0.0
        %1496 = vmatpush1.xpose.msra.mxu0 0.0
        %1497 = vmatprep.subr.mxu0 0.0
        %1498 = vmatpush1.xpose.msra.mxu0 0.0
        %1499 = vmatprep.subr.mxu0 0.0
        %1500 = vmatpush1.xpose.msra.mxu0 0.0
        %1501 = vmatprep.subr.mxu0 0.0
        %1502 = vmatpush1.xpose.msra.mxu0 0.0
        %1503 = vmatprep.subr.mxu0 0.0
        %1504 = vmatpush1.xpose.msra.mxu0 0.0
        %1505 = vmatprep.subr.mxu0 0.0
        %1506 = vmatpush1.xpose.msra.mxu0 0.0
        %1507 = vmatprep.mubr.f32.mxu0 0.0
        %1508 = vmatmul.mubr.f32.gmra.mrb[0].mxu0 %v1439
        %v1509 = vpop.f32.mrb[0].mxu0
        %v1510 = vadd.f32 %v1024, %v1509
        %v1511 = vpop.f32.mrb[0].mxu0
        %1512 = vdwg.mxu0
        %v1513 = vsel %vm1182, %v1432, -inf
        %1514 = vmax.xlane.f32.xlu0 %v1513
        %v1515 = vpop.xlane.xlu0 %1514
        %v1516 = vsel %vm1182, %v1510, -inf
        %1517 = vmax.xlane.f32.xlu0 %v1516
        %v1518 = vpop.xlane.xlu0 %1517
        %v1519 = vsub.f32 %v1432, %v1515
        %v1520 = vsub.f32 %v1510, %v1518
        %v1521 = vmul.f32 %v1519, 1.442695
        %v1522 = vpow.pop %v1521
        %v1523 = vmul.f32 %v1520, 1.442695
        %v1524 = vpow.pop %v1523
        %v1525 = vsel %vm1182, %v1522, 0.0
        %1526 = vadd.xlane.f32.xlu0 %v1525
        %v1527 = vpop.xlane.xlu0 %1526
        %v1528 = vsel %vm1182, %v1524, 0.0
        %1529 = vadd.xlane.f32.xlu0 %v1528
        %v1530 = vpop.xlane.xlu0 %1529
        %v1531 = vrcp.pop %v1527
        %v1532 = vrcp.pop %v1530
        %v1533 = vmul.f32 %v1522, %v1531
        %v1534 = vmul.f32 %v1524, %v1532
        %1535 = vrot.lane.b32.xlu0 %v1007, 48
        %v1536 = vpop.permute.xlu0 %1535
        %v1539 = vsel %vm1182, %v1533, 0
        %1541 = vmatprep.subr.mxu0 0.0
        %1542 = vmatpush1.msra.mxu0 %v1536
        %1543 = vmatprep.subr.mxu0 0.0
        %1544 = vmatpush1.msra.mxu0 0.0
        %1545 = vmatprep.subr.mxu0 0.0
        %1546 = vmatpush1.msra.mxu0 0.0
        %1547 = vmatprep.subr.mxu0 0.0
        %1548 = vmatpush1.msra.mxu0 0.0
        %1549 = vmatprep.subr.mxu0 0.0
        %1550 = vmatpush1.msra.mxu0 0.0
        %1551 = vmatprep.subr.mxu0 0.0
        %1552 = vmatpush1.msra.mxu0 0.0
        %1553 = vmatprep.subr.mxu0 0.0
        %1554 = vmatpush1.msra.mxu0 0.0
        %1555 = vmatprep.subr.mxu0 0.0
        %1556 = vmatpush1.msra.mxu0 0.0
        %1557 = vmatprep.subr.mxu0 0.0
        %1558 = vmatpush1.msra.mxu0 0.0
        %1559 = vmatprep.subr.mxu0 0.0
        %1560 = vmatpush1.msra.mxu0 0.0
        %1561 = vmatprep.subr.mxu0 0.0
        %1562 = vmatpush1.msra.mxu0 0.0
        %1563 = vmatprep.subr.mxu0 0.0
        %1564 = vmatpush1.msra.mxu0 0.0
        %1565 = vmatprep.subr.mxu0 0.0
        %1566 = vmatpush1.msra.mxu0 0.0
        %1567 = vmatprep.subr.mxu0 0.0
        %1568 = vmatpush1.msra.mxu0 0.0
        %1569 = vmatprep.subr.mxu0 0.0
        %1570 = vmatpush1.msra.mxu0 0.0
        %1571 = vmatprep.subr.mxu0 0.0
        %1572 = vmatpush1.msra.mxu0 0.0
        %1573 = vmatprep.subr.mxu0 0.0
        %1574 = vmatpush1.msra.mxu0 0.0
        %1575 = vmatprep.subr.mxu0 0.0
        %1576 = vmatpush1.msra.mxu0 0.0
        %1577 = vmatprep.subr.mxu0 0.0
        %1578 = vmatpush1.msra.mxu0 0.0
        %1579 = vmatprep.subr.mxu0 0.0
        %1580 = vmatpush1.msra.mxu0 0.0
        %1581 = vmatprep.subr.mxu0 0.0
        %1582 = vmatpush1.msra.mxu0 0.0
        %1583 = vmatprep.subr.mxu0 0.0
        %1584 = vmatpush1.msra.mxu0 0.0
        %1585 = vmatprep.subr.mxu0 0.0
        %1586 = vmatpush1.msra.mxu0 0.0
        %1587 = vmatprep.subr.mxu0 0.0
        %1588 = vmatpush1.msra.mxu0 0.0
        %1589 = vmatprep.subr.mxu0 0.0
        %1590 = vmatpush1.msra.mxu0 0.0
        %1591 = vmatprep.subr.mxu0 0.0
        %1592 = vmatpush1.msra.mxu0 0.0
        %1593 = vmatprep.subr.mxu0 0.0
        %1594 = vmatpush1.msra.mxu0 0.0
        %1595 = vmatprep.subr.mxu0 0.0
        %1596 = vmatpush1.msra.mxu0 0.0
        %1597 = vmatprep.subr.mxu0 0.0
        %1598 = vmatpush1.msra.mxu0 0.0
        %1599 = vmatprep.subr.mxu0 0.0
        %1600 = vmatpush1.msra.mxu0 0.0
        %1601 = vmatprep.subr.mxu0 0.0
        %1602 = vmatpush1.msra.mxu0 0.0
        %1603 = vmatprep.subr.mxu0 0.0
        %1604 = vmatpush1.msra.mxu0 0.0
        %1605 = vmatprep.mubr.f32.mxu0 0.0
        %1606 = vmatmul.mubr.f32.gmra.mrb[0].mxu0 %v1539
        %v1607 = vpop.f32.mrb[0].mxu0
        %v1608 = vadd.f32 0.0, %v1607
        %v1609 = vpop.f32.mrb[0].mxu0
        %1610 = vdwg.mxu0
        %1611 = vrot.lane.b32.xlu0 %v1012, 48
        %v1612 = vpop.permute.xlu0 %1611
        %v1615 = vsel %vm1182, %v1534, 0
        %1617 = vmatprep.subr.mxu0 0.0
        %1618 = vmatpush1.msra.mxu0 %v1612
        %1619 = vmatprep.subr.mxu0 0.0
        %1620 = vmatpush1.msra.mxu0 0.0
        %1621 = vmatprep.subr.mxu0 0.0
        %1622 = vmatpush1.msra.mxu0 0.0
        %1623 = vmatprep.subr.mxu0 0.0
        %1624 = vmatpush1.msra.mxu0 0.0
        %1625 = vmatprep.subr.mxu0 0.0
        %1626 = vmatpush1.msra.mxu0 0.0
        %1627 = vmatprep.subr.mxu0 0.0
        %1628 = vmatpush1.msra.mxu0 0.0
        %1629 = vmatprep.subr.mxu0 0.0
        %1630 = vmatpush1.msra.mxu0 0.0
        %1631 = vmatprep.subr.mxu0 0.0
        %1632 = vmatpush1.msra.mxu0 0.0
        %1633 = vmatprep.subr.mxu0 0.0
        %1634 = vmatpush1.msra.mxu0 0.0
        %1635 = vmatprep.subr.mxu0 0.0
        %1636 = vmatpush1.msra.mxu0 0.0
        %1637 = vmatprep.subr.mxu0 0.0
        %1638 = vmatpush1.msra.mxu0 0.0
        %1639 = vmatprep.subr.mxu0 0.0
        %1640 = vmatpush1.msra.mxu0 0.0
        %1641 = vmatprep.subr.mxu0 0.0
        %1642 = vmatpush1.msra.mxu0 0.0
        %1643 = vmatprep.subr.mxu0 0.0
        %1644 = vmatpush1.msra.mxu0 0.0
        %1645 = vmatprep.subr.mxu0 0.0
        %1646 = vmatpush1.msra.mxu0 0.0
        %1647 = vmatprep.subr.mxu0 0.0
        %1648 = vmatpush1.msra.mxu0 0.0
        %1649 = vmatprep.subr.mxu0 0.0
        %1650 = vmatpush1.msra.mxu0 0.0
        %1651 = vmatprep.subr.mxu0 0.0
        %1652 = vmatpush1.msra.mxu0 0.0
        %1653 = vmatprep.subr.mxu0 0.0
        %1654 = vmatpush1.msra.mxu0 0.0
        %1655 = vmatprep.subr.mxu0 0.0
        %1656 = vmatpush1.msra.mxu0 0.0
        %1657 = vmatprep.subr.mxu0 0.0
        %1658 = vmatpush1.msra.mxu0 0.0
        %1659 = vmatprep.subr.mxu0 0.0
        %1660 = vmatpush1.msra.mxu0 0.0
        %1661 = vmatprep.subr.mxu0 0.0
        %1662 = vmatpush1.msra.mxu0 0.0
        %1663 = vmatprep.subr.mxu0 0.0
        %1664 = vmatpush1.msra.mxu0 0.0
        %1665 = vmatprep.subr.mxu0 0.0
        %1666 = vmatpush1.msra.mxu0 0.0
        %1667 = vmatprep.subr.mxu0 0.0
        %1668 = vmatpush1.msra.mxu0 0.0
        %1669 = vmatprep.subr.mxu0 0.0
        %1670 = vmatpush1.msra.mxu0 0.0
        %1671 = vmatprep.subr.mxu0 0.0
        %1672 = vmatpush1.msra.mxu0 0.0
        %1673 = vmatprep.subr.mxu0 0.0
        %1674 = vmatpush1.msra.mxu0 0.0
        %1675 = vmatprep.subr.mxu0 0.0
        %1676 = vmatpush1.msra.mxu0 0.0
        %1677 = vmatprep.subr.mxu0 0.0
        %1678 = vmatpush1.msra.mxu0 0.0
        %1679 = vmatprep.subr.mxu0 0.0
        %1680 = vmatpush1.msra.mxu0 0.0
        %1681 = vmatprep.mubr.f32.mxu0 0.0
        %1682 = vmatmul.mubr.f32.gmra.mrb[0].mxu0 %v1615
        %v1683 = vpop.f32.mrb[0].mxu0
        %v1684 = vadd.f32 0.0, %v1683
        %v1685 = vpop.f32.mrb[0].mxu0
        %1686 = vdwg.mxu0
        %1689 = vrot.lane.b32.xlu0 %v1608, 16
        %v1690 = vpop.permute.xlu0 %1689
        %1691 = vrot.lane.b32.xlu0 %v1684, 16
        %v1692 = vpop.permute.xlu0 %1691
        %v1695 = vsel %vm1030, %v1278, %v1690
        %v1696 = vsel %vm1030, %v1354, %v1692
        %v1697 = vld [vmem:[%s741] sm:$0xff]
        %v1698 = vld [vmem:[%s741 + $0x8] sm:$0xff]
        %v1699 = vld [vmem:[%s741 + $0x10] sm:$0xff]
        %v1700 = vld [vmem:[%s741 + $0x18] sm:$0xff]
        %v1702 = vsel %vm872, %v1695, 0
        %v1705 = vsel %vm872, %v1696, 0
        %1707 = vmatprep.subr.mxu0 0.0
        %1708 = vmatpush1.msra.mxu0 %v1697
        %1709 = vmatprep.subr.mxu0 0.0
        %1710 = vmatpush1.msra.mxu0 %v1698
        %1711 = vmatprep.subr.mxu0 0.0
        %1712 = vmatpush1.msra.mxu0 %v1699
        %1713 = vmatprep.subr.mxu0 0.0
        %1714 = vmatpush1.msra.mxu0 %v1700
        %1715 = vmatprep.subr.mxu0 0.0
        %1716 = vmatpush1.msra.mxu0 0.0
        %1717 = vmatprep.subr.mxu0 0.0
        %1718 = vmatpush1.msra.mxu0 0.0
        %1719 = vmatprep.subr.mxu0 0.0
        %1720 = vmatpush1.msra.mxu0 0.0
        %1721 = vmatprep.subr.mxu0 0.0
        %1722 = vmatpush1.msra.mxu0 0.0
        %1723 = vmatprep.subr.mxu0 0.0
        %1724 = vmatpush1.msra.mxu0 0.0
        %1725 = vmatprep.subr.mxu0 0.0
        %1726 = vmatpush1.msra.mxu0 0.0
        %1727 = vmatprep.subr.mxu0 0.0
        %1728 = vmatpush1.msra.mxu0 0.0
        %1729 = vmatprep.subr.mxu0 0.0
        %1730 = vmatpush1.msra.mxu0 0.0
        %1731 = vmatprep.subr.mxu0 0.0
        %1732 = vmatpush1.msra.mxu0 0.0
        %1733 = vmatprep.subr.mxu0 0.0
        %1734 = vmatpush1.msra.mxu0 0.0
        %1735 = vmatprep.subr.mxu0 0.0
        %1736 = vmatpush1.msra.mxu0 0.0
        %1737 = vmatprep.subr.mxu0 0.0
        %1738 = vmatpush1.msra.mxu0 0.0
        %1739 = vmatprep.subr.mxu0 0.0
        %1740 = vmatpush1.msra.mxu0 0.0
        %1741 = vmatprep.subr.mxu0 0.0
        %1742 = vmatpush1.msra.mxu0 0.0
        %1743 = vmatprep.subr.mxu0 0.0
        %1744 = vmatpush1.msra.mxu0 0.0
        %1745 = vmatprep.subr.mxu0 0.0
        %1746 = vmatpush1.msra.mxu0 0.0
        %1747 = vmatprep.subr.mxu0 0.0
        %1748 = vmatpush1.msra.mxu0 0.0
        %1749 = vmatprep.subr.mxu0 0.0
        %1750 = vmatpush1.msra.mxu0 0.0
        %1751 = vmatprep.subr.mxu0 0.0
        %1752 = vmatpush1.msra.mxu0 0.0
        %1753 = vmatprep.subr.mxu0 0.0
        %1754 = vmatpush1.msra.mxu0 0.0
        %1755 = vmatprep.subr.mxu0 0.0
        %1756 = vmatpush1.msra.mxu0 0.0
        %1757 = vmatprep.subr.mxu0 0.0
        %1758 = vmatpush1.msra.mxu0 0.0
        %1759 = vmatprep.subr.mxu0 0.0
        %1760 = vmatpush1.msra.mxu0 0.0
        %1761 = vmatprep.subr.mxu0 0.0
        %1762 = vmatpush1.msra.mxu0 0.0
        %1763 = vmatprep.subr.mxu0 0.0
        %1764 = vmatpush1.msra.mxu0 0.0
        %1765 = vmatprep.subr.mxu0 0.0
        %1766 = vmatpush1.msra.mxu0 0.0
        %1767 = vmatprep.subr.mxu0 0.0
        %1768 = vmatpush1.msra.mxu0 0.0
        %1769 = vmatprep.subr.mxu0 0.0
        %1770 = vmatpush1.msra.mxu0 0.0
        %1771 = vmatprep.mubr.f32.mxu0 0.0
        %1772 = vmatmul.mubr.f32.gmra.mrb[0].mxu0 %v1702
        %v1773 = vpop.f32.mrb[0].mxu0
        %v1774 = vadd.f32 0.0, %v1773
        %v1775 = vpop.f32.mrb[0].mxu0
        %1776 = vmatprep.mubr.f32.mxu0 0.0
        %1777 = vmatmul.mubr.f32.gmra.mrb[0].mxu0 %v1705
        %v1778 = vpop.f32.mrb[0].mxu0
        %v1779 = vadd.f32 0.0, %v1778
        %v1780 = vpop.f32.mrb[0].mxu0
        %1781 = vdwg.mxu0
        %v1782 = vadd.f32 %v862, %v1774
        %v1783 = vadd.f32 %v863, %v1779
        %v1784 = vld [vmem:[%s744] sm:$0x1]
        %v1785 = vld [vmem:[%s747] sm:$0x1]
        %v1786 = vsel %vm872, %v1782, 0.0
        %1787 = vadd.xlane.f32.xlu0 %v1786
        %v1788 = vpop.xlane.xlu0 %1787
        %v1789 = vsel %vm872, %v1783, 0.0
        %1790 = vadd.xlane.f32.xlu0 %v1789
        %v1791 = vpop.xlane.xlu0 %1790
        %v1792 = vmul.f32 %v1788, %v879
        %v1793 = vmul.f32 %v1791, %v879
        %v1794 = vsub.f32 %v1782, %v1792
        %v1795 = vsub.f32 %v1783, %v1793
        %v1796 = vmul.f32 %v1794, %v1794
        %v1797 = vmul.f32 %v1795, %v1795
        %v1798 = vsel %vm872, %v1796, 0.0
        %1799 = vadd.xlane.f32.xlu0 %v1798
        %v1800 = vpop.xlane.xlu0 %1799
        %v1801 = vsel %vm872, %v1797, 0.0
        %1802 = vadd.xlane.f32.xlu0 %v1801
        %v1803 = vpop.xlane.xlu0 %1802
        %v1804 = vmul.f32 %v1800, 0.032258064
        %v1805 = vmul.f32 %v1803, 0.032258064
        %v1806 = vrsqrt.pop %v1804
        %v1807 = vmul.f32 %v1804, %v1806
        %vm1808 = vcmp.eq.f32.partialorder %v1804, inf
        %v1809 = vsel %vm1808, %v1804, %v1807
        %vm1810 = vcmp.eq.f32.partialorder %v1804, 0.0
        %v1811 = vand.u32 %v1804, 2147483648
        %v1812 = vsel %vm1810, %v1811, %v1809
        %v1813 = vrsqrt.pop %v1805
        %v1814 = vmul.f32 %v1805, %v1813
        %vm1815 = vcmp.eq.f32.partialorder %v1805, inf
        %v1816 = vsel %vm1815, %v1805, %v1814
        %vm1817 = vcmp.eq.f32.partialorder %v1805, 0.0
        %v1818 = vand.u32 %v1805, 2147483648
        %v1819 = vsel %vm1817, %v1818, %v1816
        %v1820 = vadd.f32 %v1812, 1e-06
        %v1821 = vadd.f32 %v1819, 1e-06
        %v1822 = vrcp.pop %v1820
        %v1823 = vmul.f32 %v1794, %v1822
        %v1824 = vrcp.pop %v1821
        %v1825 = vmul.f32 %v1795, %v1824
        %v1827 = vlaneseq
        %v1828 = vshrl.u32 %v1827, 7
        %v1829 = vsub.s32 0, %v1828
        %v1830 = vrot.slane %v1784, %v1829
        %v1832 = vmul.f32 %v1830, %v1823
        %v1833 = vmul.f32 %v1830, %v1825
        %v1835 = vlaneseq
        %v1836 = vshrl.u32 %v1835, 7
        %v1837 = vsub.s32 0, %v1836
        %v1838 = vrot.slane %v1785, %v1837
        %v1840 = vadd.f32 %v1832, %v1838
        %v1841 = vadd.f32 %v1833, %v1838
        %v1842 = vld [vmem:[%s3] sm:$0xff]
        %v1843 = vld [vmem:[%s3 + $0x8] sm:$0xff]
        %v1844 = vld [vmem:[%s4] sm:$0xff]
        %v1845 = vld [vmem:[%s4 + $0x8] sm:$0xff]
        %v1846 = vld [vmem:[%s752] sm:$0xff]
        %v1847 = vld [vmem:[%s752 + $0x8] sm:$0xff]
        %v1848 = vld [vmem:[%s752 + $0x10] sm:$0xff]
        %v1849 = vld [vmem:[%s752 + $0x18] sm:$0xff]
        %v1850 = vld [vmem:[%s752 + $0x20] sm:$0xff]
        %v1851 = vld [vmem:[%s752 + $0x28] sm:$0xff]
        %v1852 = vld [vmem:[%s752 + $0x30] sm:$0xff]
        %v1853 = vld [vmem:[%s752 + $0x38] sm:$0xff]
        %v1854 = vld [vmem:[%s752 + $0x40] sm:$0xff]
        %v1855 = vld [vmem:[%s752 + $0x48] sm:$0xff]
        %v1856 = vld [vmem:[%s752 + $0x50] sm:$0xff]
        %v1857 = vld [vmem:[%s752 + $0x58] sm:$0xff]
        %v1858 = vld [vmem:[%s755] sm:$0x1]
        %v1859 = vrot.slane %v1840, 7
        %v1860 = vrot.slane %v1841, 7
        %v1861 = vlaneseq
        %v1862 = vshrl.u32 %v1861, 7
        %vm1863 = vcmp.lt.s32.totalorder %v1862, 1
        %v1864 = vsel %vm1863, %v1859, %v1860
        %v1865 = vsel %vm1863, %v1860, %v1859
        %1867 = vset.pattern.permute.xlu0 0
        %1868 = vperm.xlu0 %1867, %v1842
        %v1869 = vpop.permute.xlu0 %1868
        %1872 = vset.pattern.permute.xlu0 0
        %1873 = vperm.xlu0 %1872, %v1843
        %v1874 = vpop.permute.xlu0 %1873
        %v1876 = vmul.f32 %v1865, %v1869
        %v1877 = vmul.f32 %v1864, %v1874
        %v1878 = vrot.slane %v1840, 1
        %v1879 = vrot.slane %v1841, 1
        %vm1880 = vcmp.lt.s32.totalorder %v1862, 7
        %v1881 = vsel %vm1880, %v1878, %v1879
        %v1882 = vsel %vm1880, %v1879, %v1878
        %1884 = vset.pattern.permute.xlu0 0
        %1885 = vperm.xlu0 %1884, %v1844
        %v1886 = vpop.permute.xlu0 %1885
        %1889 = vset.pattern.permute.xlu0 0
        %1890 = vperm.xlu0 %1889, %v1845
        %v1891 = vpop.permute.xlu0 %1890
        %v1893 = vmul.f32 %v1881, %v1886
        %v1894 = vmul.f32 %v1882, %v1891
        %1897 = vrot.lane.b32.xlu0 %v1840, 32
        %v1898 = vpop.permute.xlu0 %1897
        %1899 = vrot.lane.b32.xlu0 %v1841, 32
        %v1900 = vpop.permute.xlu0 %1899
        %1905 = vrot.lane.b32.xlu0 %v1893, 64
        %v1906 = vpop.permute.xlu0 %1905
        %1907 = vrot.lane.b32.xlu0 %v1894, 64
        %v1908 = vpop.permute.xlu0 %1907
        %v1911 = vsel %vm872, %v1876, %v1898
        %v1912 = vsel %vm872, %v1877, %v1900
        %vm1913 = vcmask 523264
        %v1914 = vsel %vm1913, %v1911, %v1906
        %v1915 = vsel %vm1913, %v1912, %v1908
        %v1917 = vlaneseq
        %v1918 = vshrl.u32 %v1917, 7
        %v1919 = vsub.s32 0, %v1918
        %v1920 = vrot.slane %v1858, %v1919
        %vm1922 = vcmask 785408
        %v1924 = vsel %vm1922, %v1914, 0
        %v1927 = vsel %vm1922, %v1915, 0
        %1929 = vmatprep.subr.mxu0 0.0
        %1930 = vmatpush1.msra.mxu0 %v1846
        %1931 = vmatprep.subr.mxu0 0.0
        %1932 = vmatpush1.msra.mxu0 %v1847
        %1933 = vmatprep.subr.mxu0 0.0
        %1934 = vmatpush1.msra.mxu0 %v1848
        %1935 = vmatprep.subr.mxu0 0.0
        %1936 = vmatpush1.msra.mxu0 %v1849
        %1937 = vmatprep.subr.mxu0 0.0
        %1938 = vmatpush1.msra.mxu0 %v1850
        %1939 = vmatprep.subr.mxu0 0.0
        %1940 = vmatpush1.msra.mxu0 %v1851
        %1941 = vmatprep.subr.mxu0 0.0
        %1942 = vmatpush1.msra.mxu0 %v1852
        %1943 = vmatprep.subr.mxu0 0.0
        %1944 = vmatpush1.msra.mxu0 %v1853
        %1945 = vmatprep.subr.mxu0 0.0
        %1946 = vmatpush1.msra.mxu0 %v1854
        %1947 = vmatprep.subr.mxu0 0.0
        %1948 = vmatpush1.msra.mxu0 %v1855
        %1949 = vmatprep.subr.mxu0 0.0
        %1950 = vmatpush1.msra.mxu0 %v1856
        %1951 = vmatprep.subr.mxu0 0.0
        %1952 = vmatpush1.msra.mxu0 %v1857
        %1953 = vmatprep.subr.mxu0 0.0
        %1954 = vmatpush1.msra.mxu0 0.0
        %1955 = vmatprep.subr.mxu0 0.0
        %1956 = vmatpush1.msra.mxu0 0.0
        %1957 = vmatprep.subr.mxu0 0.0
        %1958 = vmatpush1.msra.mxu0 0.0
        %1959 = vmatprep.subr.mxu0 0.0
        %1960 = vmatpush1.msra.mxu0 0.0
        %1961 = vmatprep.subr.mxu0 0.0
        %1962 = vmatpush1.msra.mxu0 0.0
        %1963 = vmatprep.subr.mxu0 0.0
        %1964 = vmatpush1.msra.mxu0 0.0
        %1965 = vmatprep.subr.mxu0 0.0
        %1966 = vmatpush1.msra.mxu0 0.0
        %1967 = vmatprep.subr.mxu0 0.0
        %1968 = vmatpush1.msra.mxu0 0.0
        %1969 = vmatprep.subr.mxu0 0.0
        %1970 = vmatpush1.msra.mxu0 0.0
        %1971 = vmatprep.subr.mxu0 0.0
        %1972 = vmatpush1.msra.mxu0 0.0
        %1973 = vmatprep.subr.mxu0 0.0
        %1974 = vmatpush1.msra.mxu0 0.0
        %1975 = vmatprep.subr.mxu0 0.0
        %1976 = vmatpush1.msra.mxu0 0.0
        %1977 = vmatprep.subr.mxu0 0.0
        %1978 = vmatpush1.msra.mxu0 0.0
        %1979 = vmatprep.subr.mxu0 0.0
        %1980 = vmatpush1.msra.mxu0 0.0
        %1981 = vmatprep.subr.mxu0 0.0
        %1982 = vmatpush1.msra.mxu0 0.0
        %1983 = vmatprep.subr.mxu0 0.0
        %1984 = vmatpush1.msra.mxu0 0.0
        %1985 = vmatprep.subr.mxu0 0.0
        %1986 = vmatpush1.msra.mxu0 0.0
        %1987 = vmatprep.subr.mxu0 0.0
        %1988 = vmatpush1.msra.mxu0 0.0
        %1989 = vmatprep.subr.mxu0 0.0
        %1990 = vmatpush1.msra.mxu0 0.0
        %1991 = vmatprep.subr.mxu0 0.0
        %1992 = vmatpush1.msra.mxu0 0.0
        %1993 = vmatprep.mubr.f32.mxu0 0.0
        %1994 = vmatmul.mubr.f32.gmra.mrb[0].mxu0 %v1924
        %v1995 = vpop.f32.mrb[0].mxu0
        %v1996 = vadd.f32 %v1920, %v1995
        %v1997 = vpop.f32.mrb[0].mxu0
        %1998 = vmatprep.mubr.f32.mxu0 0.0
        %1999 = vmatmul.mubr.f32.gmra.mrb[0].mxu0 %v1927
        %v2000 = vpop.f32.mrb[0].mxu0
        %v2001 = vadd.f32 %v1920, %v2000
        %v2002 = vpop.f32.mrb[0].mxu0
        %2003 = vdwg.mxu0
        %v2004 = vmax.f32 %v1996, 0.0
        %v2005 = vmax.f32 %v2001, 0.0
        %v2006 = vld [vmem:[%s760] sm:$0xff]
        %v2007 = vld [vmem:[%s760 + $0x8] sm:$0xff]
        %v2008 = vld [vmem:[%s760 + $0x10] sm:$0xff]
        %v2009 = vld [vmem:[%s760 + $0x18] sm:$0xff]
        %v2010 = vld [vmem:[%s760 + $0x20] sm:$0xff]
        %v2011 = vld [vmem:[%s760 + $0x28] sm:$0xff]
        %v2012 = vld [vmem:[%s760 + $0x30] sm:$0xff]
        %v2013 = vld [vmem:[%s760 + $0x38] sm:$0xff]
        %v2014 = vld [vmem:[%s760 + $0x40] sm:$0xff]
        %v2015 = vld [vmem:[%s760 + $0x48] sm:$0xff]
        %v2016 = vld [vmem:[%s760 + $0x50] sm:$0xff]
        %v2017 = vld [vmem:[%s760 + $0x58] sm:$0xff]
        %v2018 = vld [vmem:[%s760 + $0x60] sm:$0xff]
        %v2019 = vld [vmem:[%s760 + $0x68] sm:$0xff]
        %v2020 = vld [vmem:[%s760 + $0x70] sm:$0xff]
        %v2021 = vld [vmem:[%s760 + $0x78] sm:$0xff]
        %v2022 = vld [vmem:[%s760 + $0x80] sm:$0xff]
        %v2023 = vld [vmem:[%s760 + $0x88] sm:$0xff]
        %v2024 = vld [vmem:[%s760 + $0x90] sm:$0xff]
        %v2025 = vld [vmem:[%s760 + $0x98] sm:$0xff]
        %v2026 = vld [vmem:[%s760 + $0xa0] sm:$0xff]
        %v2027 = vld [vmem:[%s760 + $0xa8] sm:$0xff]
        %v2028 = vld [vmem:[%s760 + $0xb0] sm:$0xff]
        %v2029 = vld [vmem:[%s760 + $0xb8] sm:$0xff]
        %v2030 = vld [vmem:[%s763] sm:$0x1]
        %v2031 = vrot.slane %v2004, 7
        %v2032 = vrot.slane %v2005, 7
        %v2033 = vsel %vm1863, %v2031, %v2032
        %v2034 = vsel %vm1863, %v2032, %v2031
        %v2035 = vmul.f32 %v2034, %v1869
        %v2036 = vmul.f32 %v2033, %v1874
        %v2037 = vrot.slane %v2004, 1
        %v2038 = vrot.slane %v2005, 1
        %v2039 = vsel %vm1880, %v2037, %v2038
        %v2040 = vsel %vm1880, %v2038, %v2037
        %v2041 = vmul.f32 %v2039, %v1886
        %v2042 = vmul.f32 %v2040, %v1891
        %2045 = vrot.lane.b32.xlu0 %v2004, 64
        %v2046 = vpop.permute.xlu0 %2045
        %2047 = vrot.lane.b32.xlu0 %v2005, 64
        %v2048 = vpop.permute.xlu0 %2047
        %v2051 = vsel %vm1913, %v2035, %v2046
        %v2052 = vsel %vm1913, %v2036, %v2048
        %v2054 = vlaneseq
        %v2055 = vshrl.u32 %v2054, 7
        %v2056 = vsub.s32 0, %v2055
        %v2057 = vrot.slane %v2030, %v2056
        %v2060 = vsel %vm1913, %v2041, 0
        %v2063 = vsel %vm1913, %v2042, 0
        %2065 = vmatprep.subr.mxu0 0.0
        %2066 = vmatpush1.msra.mxu0 %v2006
        %2067 = vmatprep.subr.mxu0 0.0
        %2068 = vmatpush1.msra.mxu0 %v2007
        %2069 = vmatprep.subr.mxu0 0.0
        %2070 = vmatpush1.msra.mxu0 %v2008
        %2071 = vmatprep.subr.mxu0 0.0
        %2072 = vmatpush1.msra.mxu0 %v2009
        %2073 = vmatprep.subr.mxu0 0.0
        %2074 = vmatpush1.msra.mxu0 %v2010
        %2075 = vmatprep.subr.mxu0 0.0
        %2076 = vmatpush1.msra.mxu0 %v2011
        %2077 = vmatprep.subr.mxu0 0.0
        %2078 = vmatpush1.msra.mxu0 %v2012
        %2079 = vmatprep.subr.mxu0 0.0
        %2080 = vmatpush1.msra.mxu0 %v2013
        %2081 = vmatprep.subr.mxu0 0.0
        %2082 = vmatpush1.msra.mxu0 %v2014
        %2083 = vmatprep.subr.mxu0 0.0
        %2084 = vmatpush1.msra.mxu0 %v2015
        %2085 = vmatprep.subr.mxu0 0.0
        %2086 = vmatpush1.msra.mxu0 %v2016
        %2087 = vmatprep.subr.mxu0 0.0
        %2088 = vmatpush1.msra.mxu0 %v2017
        %2089 = vmatprep.subr.mxu0 0.0
        %2090 = vmatpush1.msra.mxu0 %v2018
        %2091 = vmatprep.subr.mxu0 0.0
        %2092 = vmatpush1.msra.mxu0 %v2019
        %2093 = vmatprep.subr.mxu0 0.0
        %2094 = vmatpush1.msra.mxu0 %v2020
        %2095 = vmatprep.subr.mxu0 0.0
        %2096 = vmatpush1.msra.mxu0 %v2021
        %2097 = vmatprep.subr.mxu0 0.0
        %2098 = vmatpush1.msra.mxu0 %v2022
        %2099 = vmatprep.subr.mxu0 0.0
        %2100 = vmatpush1.msra.mxu0 %v2023
        %2101 = vmatprep.subr.mxu0 0.0
        %2102 = vmatpush1.msra.mxu0 %v2024
        %2103 = vmatprep.subr.mxu0 0.0
        %2104 = vmatpush1.msra.mxu0 %v2025
        %2105 = vmatprep.subr.mxu0 0.0
        %2106 = vmatpush1.msra.mxu0 %v2026
        %2107 = vmatprep.subr.mxu0 0.0
        %2108 = vmatpush1.msra.mxu0 %v2027
        %2109 = vmatprep.subr.mxu0 0.0
        %2110 = vmatpush1.msra.mxu0 %v2028
        %2111 = vmatprep.subr.mxu0 0.0
        %2112 = vmatpush1.msra.mxu0 %v2029
        %2113 = vmatprep.subr.mxu0 0.0
        %2114 = vmatpush1.msra.mxu0 0.0
        %2115 = vmatprep.subr.mxu0 0.0
        %2116 = vmatpush1.msra.mxu0 0.0
        %2117 = vmatprep.subr.mxu0 0.0
        %2118 = vmatpush1.msra.mxu0 0.0
        %2119 = vmatprep.subr.mxu0 0.0
        %2120 = vmatpush1.msra.mxu0 0.0
        %2121 = vmatprep.subr.mxu0 0.0
        %2122 = vmatpush1.msra.mxu0 0.0
        %2123 = vmatprep.subr.mxu0 0.0
        %2124 = vmatpush1.msra.mxu0 0.0
        %2125 = vmatprep.subr.mxu0 0.0
        %2126 = vmatpush1.msra.mxu0 0.0
        %2127 = vmatprep.subr.mxu0 0.0
        %2128 = vmatpush1.msra.mxu0 0.0
        %2129 = vmatprep.mubr.f32.mxu0 %v2060
        %2130 = vmatmul.mubr.f32.gmra.mrb[0].mxu0 %v2051
        %v2131 = vpop.f32.mrb[0].mxu0
        %v2132 = vadd.f32 %v2057, %v2131
        %v2133 = vpop.f32.mrb[0].mxu0
        %2134 = vmatprep.mubr.f32.mxu0 %v2063
        %2135 = vmatmul.mubr.f32.gmra.mrb[0].mxu0 %v2052
        %v2136 = vpop.f32.mrb[0].mxu0
        %v2137 = vadd.f32 %v2057, %v2136
        %v2138 = vpop.f32.mrb[0].mxu0
        %2139 = vdwg.mxu0
        %v2140 = vadd.f32 %v1782, %v2132
        %v2141 = vadd.f32 %v1783, %v2137
        %2142 = vst.msk [vmem:[#allocation2] sm:$0xff] %vm872, %v2140
        %2143 = vst.msk [vmem:[#allocation2 + $0x8] sm:$0xff] %vm872, %v2141
        %p2144 = scmp.eq.s32.totalorder %s35, 1
        // Predicated region
        $region97: #{tpu_custom_call.1} parent=91 // pred_check
          %p2145 = pneg %p2144
        $region98: #{tpu_custom_call.1} parent=91 // pred_check_branch
          %2147 = sbr.rel (%p2145) target = $region100
        $region99: #{tpu_custom_call.1} parent=91 // pred_region
          %v2148 = vld [vmem:[%s16] sm:$0x1]
          %v2149 = vld [vmem:[%s17] sm:$0x1]
          %v2150 = vsel %vm872, %v2140, 0.0
          %2151 = vadd.xlane.f32.xlu0 %v2150
          %v2152 = vpop.xlane.xlu0 %2151
          %v2153 = vsel %vm872, %v2141, 0.0
          %2154 = vadd.xlane.f32.xlu0 %v2153
          %v2155 = vpop.xlane.xlu0 %2154
          %v2156 = vmul.f32 %v2152, %v879
          %v2157 = vmul.f32 %v2155, %v879
          %v2158 = vsub.f32 %v2140, %v2156
          %v2159 = vsub.f32 %v2141, %v2157
          %v2160 = vmul.f32 %v2158, %v2158
          %v2161 = vmul.f32 %v2159, %v2159
          %v2162 = vsel %vm872, %v2160, 0.0
          %2163 = vadd.xlane.f32.xlu0 %v2162
          %v2164 = vpop.xlane.xlu0 %2163
          %v2165 = vsel %vm872, %v2161, 0.0
          %2166 = vadd.xlane.f32.xlu0 %v2165
          %v2167 = vpop.xlane.xlu0 %2166
          %v2168 = vmul.f32 %v2164, 0.032258064
          %v2169 = vmul.f32 %v2167, 0.032258064
          %v2170 = vrsqrt.pop %v2168
          %v2171 = vmul.f32 %v2168, %v2170
          %vm2172 = vcmp.eq.f32.partialorder %v2168, inf
          %v2173 = vsel %vm2172, %v2168, %v2171
          %vm2174 = vcmp.eq.f32.partialorder %v2168, 0.0
          %v2175 = vand.u32 %v2168, 2147483648
          %v2176 = vsel %vm2174, %v2175, %v2173
          %v2177 = vrsqrt.pop %v2169
          %v2178 = vmul.f32 %v2169, %v2177
          %vm2179 = vcmp.eq.f32.partialorder %v2169, inf
          %v2180 = vsel %vm2179, %v2169, %v2178
          %vm2181 = vcmp.eq.f32.partialorder %v2169, 0.0
          %v2182 = vand.u32 %v2169, 2147483648
          %v2183 = vsel %vm2181, %v2182, %v2180
          %v2184 = vadd.f32 %v2176, 1e-06
          %v2185 = vadd.f32 %v2183, 1e-06
          %v2186 = vrcp.pop %v2184
          %v2187 = vmul.f32 %v2158, %v2186
          %v2188 = vrcp.pop %v2185
          %v2189 = vmul.f32 %v2159, %v2188
          %v2191 = vlaneseq
          %v2192 = vshrl.u32 %v2191, 7
          %v2193 = vsub.s32 0, %v2192
          %v2194 = vrot.slane %v2148, %v2193
          %v2196 = vmul.f32 %v2194, %v2187
          %v2197 = vmul.f32 %v2194, %v2189
          %v2199 = vlaneseq
          %v2200 = vshrl.u32 %v2199, 7
          %v2201 = vsub.s32 0, %v2200
          %v2202 = vrot.slane %v2149, %v2201
          %v2204 = vadd.f32 %v2196, %v2202
          %v2205 = vadd.f32 %v2197, %v2202
          %2206 = vst.msk [vmem:[#allocation3] sm:$0xff] %vm872, %v2204
          %2207 = vst.msk [vmem:[#allocation3 + $0x8] sm:$0xff] %vm872, %v2205
        $region100: #{tpu_custom_call.1} parent=91 // pred_fallthru
          _
        // Predicated region
        $region101: #{tpu_custom_call.1} parent=91 // pred_check
          %p2208 = pneg %p498
        $region102: #{tpu_custom_call.1} parent=91 // pred_check_branch
          %2210 = sbr.rel (%p2208) target = $region104
        $region103: #{tpu_custom_call.1} parent=91 // pred_region
          %s2211 = smul.u32 2, %s34
          %s2213 = ssub.s32 256, 256
          %2214 = vsyncadd [#allocation4], %s2213
          %s2215 = smul.addr %s2211, 128
          %s2216 = scalar_lea.hbm %s18, %s2215
          %s2217 = sshll.u32 [#allocation3], 4
          %s2218 = int_to_ptr.vmem [resolvable:$true] %s2217
          %2223 = dma.vmem_to_hbm [thread:$0]  %s2218, 256, %s2216, [#allocation4], 128, 128, 8
        $region104: #{tpu_custom_call.1} parent=91 // pred_fallthru
          _
        // Predicated region
        $region105: #{tpu_custom_call.1} parent=91 // pred_check
          %p2224 = pneg %p498
        $region106: #{tpu_custom_call.1} parent=91 // pred_check_branch
          %2226 = sbr.rel (%p2224) target = $region108
        $region107: #{tpu_custom_call.1} parent=91 // pred_region
          %2227 = dma.done [#allocation4], 256
        $region108: #{tpu_custom_call.1} parent=91 // pred_fallthru
          _
      $region92: #{tpu_custom_call.1} parent=5 // pred_fallthru
        _
      %p2228 = scmp.le.s32.totalorder 2, %s25
      // Predicated region
      $region109: #{tpu_custom_call.1} parent=5 // pred_check
        %p2229 = pneg %p2228
      $region110: #{tpu_custom_call.1} parent=5 // pred_check_branch
        %2231 = sbr.rel (%p2229) target = $region112
      $region111: #{tpu_custom_call.1} parent=5 // pred_region
        %s2232 = ssub.s32 %s25, 2
      $region112: #{tpu_custom_call.1} parent=5 // pred_fallthru
        _
    $region6: #{tpu_custom_call.1} parent=1 // loop_footer
      %s29 = sadd.s32 1, %s25
    $region7: #{tpu_custom_call.1} parent=1 // loop_footer_branch
      %24 = sbr.rel target = $region3
    $region8: #{tpu_custom_call.1} parent=1 // loop_exit
      _
    %2233 = vsyncpa [#allocation4], 1
    %s2234 = scalar_lea.sflag [#allocation4], 1
    %2235 = vsyncpa %s2234, 1

</llo_original>
